<compile_context>
chip_gen: v7x
topology: tpu7x:2x2x1
jax: 0.10.0
libtpu: 0.0.40
codegen_flags: <defaults>
</compile_context>

<pallas_src>
import functools

import jax
import jax.numpy as jnp
from jax.experimental import pallas as pl
from jax.experimental.pallas import tpu as pltpu


# ----------------------------------------------------------------------------
# Fused kernel: one (batch, q-tile) program.
#   qi == 0 : kv = x @ W_kv  -> VMEM scratch (reused by all q tiles of batch b)
#   every qi: q = (x_q @ W_q) * C**-0.5
#             flash loop over KV tiles 0..qi (online softmax, per head)
#             y = sum_h out_h @ Wp[h*hs:(h+1)*hs, :] + bp
# ----------------------------------------------------------------------------
def _mha_fused_kernel(x_ref, wq_ref, wkv_ref, wp_ref, bp_ref, o_ref,
                      k_vmem, v_vmem, m_s, l_s, acc_s,
                      *, num_heads, q_tile):
    T = x_ref.shape[1]
    C = x_ref.shape[2]
    hs = C // num_heads

    qi = pl.program_id(1)
    q_start = pl.multiple_of(qi * q_tile, q_tile)

    # --- K/V projection once per batch (qi is the innermost, "arbitrary" axis,
    #     so qi == 0 runs first for every batch handled by this core). --------
    @pl.when(qi == 0)
    def _():
        x_all = x_ref[0]                                              # (T, C) bf16
        kv = jnp.dot(x_all, wkv_ref[...],
                     preferred_element_type=jnp.float32)              # (T, 2C) f32
        k_vmem[...] = kv[:, :C].astype(jnp.bfloat16)
        v_vmem[...] = kv[:, C:].astype(jnp.bfloat16)

    # --- Q projection for this q tile. NOTE: reference Head.forward scales by
    #     C**-0.5 (full embedding dim, NOT head_size**-0.5) -- reproduced
    #     verbatim; the scale is folded into q before the bf16 cast. ----------
    scale = C ** (-0.5)
    x_q = x_ref[0, pl.ds(q_start, q_tile), :]                         # (TQ, C) bf16
    q = (jnp.dot(x_q, wq_ref[...],
                 preferred_element_type=jnp.float32) * scale)
    q = q.astype(jnp.bfloat16)                                        # (TQ, C)

    # --- online-softmax state (per head), reset every program ----------------
    m_s[...] = jnp.full_like(m_s, -1e30)
    l_s[...] = jnp.zeros_like(l_s)
    acc_s[...] = jnp.zeros_like(acc_s)

    row = q_start + jax.lax.broadcasted_iota(jnp.int32, (q_tile, q_tile), 0)
    col_base = jax.lax.broadcasted_iota(jnp.int32, (q_tile, q_tile), 1)

    # --- causal flash loop: only KV tiles 0..qi can contain unmasked keys ----
    @pl.loop(0, qi + 1)
    def _(j):
        kv_start = pl.multiple_of(j * q_tile, q_tile)
        k_tile = k_vmem[pl.ds(kv_start, q_tile), :]                   # (KT, C) bf16
        v_tile = v_vmem[pl.ds(kv_start, q_tile), :]                   # (KT, C) bf16
        # Only the diagonal tile actually needs this mask (earlier tiles are
        # all-ones); the compare+select is cheap relative to the matmuls.
        mask = row >= (kv_start + col_base)

        for h in range(num_heads):                                    # static unroll
            sl = slice(h * hs, (h + 1) * hs)
            # q_h @ k_h^T without an explicit transpose (contract dim 1 w/ 1).
            s = jax.lax.dot_general(
                q[:, sl], k_tile[:, sl], (((1,), (1,)), ((), ())),
                preferred_element_type=jnp.float32)                   # (TQ, KT)
            # Large finite negative (not -inf) so a hypothetically fully-masked
            # row can never produce NaN.
            s = jnp.where(mask, s, -1e30)

            m_prev = m_s[h]                                           # (TQ, 1)
            m_new = jnp.maximum(m_prev, jnp.max(s, axis=-1, keepdims=True))
            alpha = jnp.exp(m_prev - m_new)
            p = jnp.exp(s - m_new)                                    # unnormalized
            l_s[h] = alpha * l_s[h] + jnp.sum(p, axis=-1, keepdims=True)
            acc_s[h] = alpha * acc_s[h] + jnp.dot(
                p.astype(jnp.bfloat16), v_tile[:, sl],
                preferred_element_type=jnp.float32)                   # (TQ, hs)
            m_s[h] = m_new

    # --- normalize AFTER the PV matmul and fuse the output projection:
    #     y = sum_h (acc_h / l_h) @ Wp[h*hs:(h+1)*hs, :] + bp -----------------
    y = jnp.zeros((q_tile, C), jnp.float32)
    for h in range(num_heads):
        out_h = acc_s[h] * pl.reciprocal(l_s[h], approx=True)         # (TQ, hs) f32
        y = y + jnp.dot(out_h.astype(jnp.bfloat16),
                        wp_ref[pl.ds(h * hs, hs), :],
                        preferred_element_type=jnp.float32)           # (TQ, C)
    o_ref[0] = (y + bp_ref[...]).astype(o_ref.dtype)


# ----------------------------------------------------------------------------
# Wrapper
# ----------------------------------------------------------------------------
def multi_head_attention(x, params, *, q_tile=None):
    """x: (B, T, C); params = (wq, wk, wv, wp, bp) with wq/wk/wv: (H, C, hs)
    (pre-transposed per-head nn.Linear weights), wp: (C, C) pre-transposed,
    bp: (1, C). Returns (B, T, C) float32."""
    wq, wk, wv, wp, bp = params
    B, T, C = x.shape
    H, _, hs = wq.shape
    assert H * hs == C

    if q_tile is None:
        # v5e: 128 fills the 4x128^2 MXU M dim; v6e: 256; v7x: VMEM-limited.
        q_tile = min(T, 128)
    assert T % q_tile == 0 and q_tile % 8 == 0
    num_q_tiles = T // q_tile

    # Pack per-head projection weights: w_q = all query heads (C, C),
    # w_kv = [key heads | value heads] (C, 2C); head h at cols [h*hs,(h+1)*hs).
    def _cat_heads(w):
        return jnp.transpose(w, (1, 0, 2)).reshape(C, H * hs)

    # bf16 MXU inputs (halves HBM DMA + VMEM); accumulation stays f32 in-kernel.
    x_bf = x.astype(jnp.bfloat16)
    w_q = _cat_heads(wq).astype(jnp.bfloat16)                         # (C, C)
    w_kv = jnp.concatenate([_cat_heads(wk), _cat_heads(wv)],
                           axis=-1).astype(jnp.bfloat16)              # (C, 2C)
    w_p = wp.astype(jnp.bfloat16)                                     # (C, C)
    bp_f32 = bp.astype(jnp.float32)                                   # (1, C)

    flops = (
        2 * B * T * C * C                 # Q projection (total over q tiles)
        + 2 * B * T * C * 2 * C           # K/V projection (once per batch)
        + 2 * 2 * B * (T * T // 2) * C    # causal scores + PV
        + 2 * B * T * C * C               # output projection
    )
    transcendentals = B * H * (T * T // 2)                            # exp (causal)
    bytes_accessed = (
        2 * B * T * C                     # x (bf16, constant index across qi)
        + 2 * (C * C + C * 2 * C + C * C) # bf16 weights, fetched once
        + 4 * C                           # bias (f32)
        + 4 * B * T * C                   # output (f32)
    )

    kernel = functools.partial(_mha_fused_kernel, num_heads=H, q_tile=q_tile)
    weight_mode = pl.Buffered(1)          # constant-index blocks: no double-buffer
    return pl.pallas_call(
        kernel,
        out_shape=jax.ShapeDtypeStruct((B, T, C), jnp.float32),
        grid_spec=pltpu.PrefetchScalarGridSpec(
            num_scalar_prefetch=0,
            grid=(B, num_q_tiles),
            in_specs=[
                pl.BlockSpec((1, T, C), lambda b, qi: (b, 0, 0)),
                pl.BlockSpec((C, C), lambda b, qi: (0, 0),
                             pipeline_mode=weight_mode),
                pl.BlockSpec((C, 2 * C), lambda b, qi: (0, 0),
                             pipeline_mode=weight_mode),
                pl.BlockSpec((C, C), lambda b, qi: (0, 0),
                             pipeline_mode=weight_mode),
                pl.BlockSpec((1, C), lambda b, qi: (0, 0),
                             pipeline_mode=weight_mode),
            ],
            out_specs=pl.BlockSpec((1, q_tile, C), lambda b, qi: (b, qi, 0)),
            scratch_shapes=[
                pltpu.VMEM((T, C), jnp.bfloat16),         # K (per batch)
                pltpu.VMEM((T, C), jnp.bfloat16),         # V (per batch)
                pltpu.VMEM((H, q_tile, 1), jnp.float32),  # m (online softmax)
                pltpu.VMEM((H, q_tile, 1), jnp.float32),  # l
                pltpu.VMEM((H, q_tile, hs), jnp.float32), # acc
            ],
        ),
        compiler_params=pltpu.CompilerParams(
            # K/V scratch reuse requires qi sequential ("arbitrary"); batch
            # carries the megacore (v7x 2-TC) parallelism.
            dimension_semantics=("parallel", "arbitrary"),
            vmem_limit_bytes=64 * 1024 * 1024,
        ),
        cost_estimate=pl.CostEstimate(
            flops=flops,
            transcendentals=transcendentals,
            bytes_accessed=bytes_accessed,
        ),
    )(x_bf, w_q, w_kv, w_p, bp_f32)


# ----------------------------------------------------------------------------
# Pure-JAX reference (mirrors the PyTorch module in eval mode) + params
# ----------------------------------------------------------------------------
def _mha_reference(x, params):
    wq, wk, wv, wp, bp = params
    B, T, C = x.shape
    tril = jnp.tril(jnp.ones((T, T), dtype=bool))
    outs = []
    for h in range(wq.shape[0]):
        q = x @ wq[h]
        k = x @ wk[h]
        v = x @ wv[h]
        wei = jnp.einsum("btd,bsd->bts", q, k) * (C ** -0.5)
        wei = jnp.where(tril, wei, -jnp.inf)
        wei = jax.nn.softmax(wei, axis=-1)
        outs.append(wei @ v)
    cat = jnp.concatenate(outs, axis=-1)
    return cat @ wp + bp


def init_params(key, num_heads, head_size, n_embd):
    k1, k2, k3, k4, k5 = jax.random.split(key, 5)
    s = 0.02
    wq = s * jax.random.normal(k1, (num_heads, n_embd, head_size), jnp.float32)
    wk = s * jax.random.normal(k2, (num_heads, n_embd, head_size), jnp.float32)
    wv = s * jax.random.normal(k3, (num_heads, n_embd, head_size), jnp.float32)
    wp = s * jax.random.normal(k4, (n_embd, n_embd), jnp.float32)
    bp = s * jax.random.normal(k5, (1, n_embd), jnp.float32)
    return wq, wk, wv, wp, bp


if __name__ == "__main__":
    # Small shapes consistent with the module's forward (B, T, C), H * hs = C.
    B, T = 2, 128
    n_embd = 128          # lane-dense last dim
    num_heads = 4
    head_size = n_embd // num_heads

    key = jax.random.PRNGKey(0)
    kx, kp = jax.random.split(key)
    x = jax.random.normal(kx, (B, T, n_embd), jnp.float32)
    params = init_params(kp, num_heads, head_size, n_embd)

    # q_tile=32 -> grid (2, 4): exercises the per-batch K/V scratch path and
    # multi-tile causal online-softmax loop.
    out = multi_head_attention(x, params, q_tile=32)
    jax.block_until_ready(out)
    assert out.shape == (B, T, n_embd)

    ref = _mha_reference(x, params)
    assert jnp.allclose(out, ref, atol=3e-2, rtol=3e-2), float(
        jnp.max(jnp.abs(out - ref)))

    print("KERNEL_OK")
</pallas_src>

<mosaic_0001>
module attributes {stable_mosaic.version = 11 : i64} {
  func.func @_mha_fused_kernel(%arg0: i32, %arg1: i32, %arg2: memref<1x128x128xbf16, #tpu.memory_space<vmem>>, %arg3: memref<128x128xbf16, #tpu.memory_space<vmem>>, %arg4: memref<128x256xbf16, #tpu.memory_space<vmem>>, %arg5: memref<128x128xbf16, #tpu.memory_space<vmem>>, %arg6: memref<1x128xf32, #tpu.memory_space<vmem>>, %arg7: memref<1x32x128xf32, #tpu.memory_space<vmem>>, %arg8: memref<128x128xbf16, #tpu.memory_space<vmem>>, %arg9: memref<128x128xbf16, #tpu.memory_space<vmem>>, %arg10: memref<4x32x1xf32, #tpu.memory_space<vmem>>, %arg11: memref<4x32x1xf32, #tpu.memory_space<vmem>>, %arg12: memref<4x32x32xf32, #tpu.memory_space<vmem>>) attributes {dimension_semantics = [#tpu.dimension_semantics<parallel>, #tpu.dimension_semantics<arbitrary>], iteration_bounds = array<i64: 2, 4>, scalar_prefetch = 0 : i64, scratch_operands = 5 : i64, tpu.core_type = #tpu.core_type<tc>, window_params = [{transform_indices = @transform_0, window_bounds = array<i64: 1, 128, 128>}, {pipeline_mode = #tpu.pipeline_mode<synchronous>, transform_indices = @transform_1, window_bounds = array<i64: 128, 128>}, {pipeline_mode = #tpu.pipeline_mode<synchronous>, transform_indices = @transform_2, window_bounds = array<i64: 128, 256>}, {pipeline_mode = #tpu.pipeline_mode<synchronous>, transform_indices = @transform_3, window_bounds = array<i64: 128, 128>}, {pipeline_mode = #tpu.pipeline_mode<synchronous>, transform_indices = @transform_4, window_bounds = array<i64: 1, 128>}, {transform_indices = @transform_5, window_bounds = array<i64: 1, 32, 128>}]} {
    %c32_i32 = arith.constant 32 : i32
    %0 = arith.muli %arg1, %c32_i32 : i32
    %1 = tpu.assume_multiple %0, 32 : i32
    %c0_i32 = arith.constant 0 : i32
    %2 = arith.cmpi eq, %arg1, %c0_i32 : i32
    %3 = arith.extui %2 : i1 to i32
    %c0_i32_0 = arith.constant 0 : i32
    %4 = arith.cmpi ne, %3, %c0_i32_0 : i32
    scf.if %4 {
      %c0_61 = arith.constant 0 : index
      %c0_62 = arith.constant 0 : index
      %c0_63 = arith.constant 0 : index
      %81 = vector.load %arg2[%c0_61, %c0_62, %c0_63] : memref<1x128x128xbf16, #tpu.memory_space<vmem>>, vector<1x128x128xbf16>
      %82 = vector.shape_cast %81 : vector<1x128x128xbf16> to vector<128x128xbf16>
      %c0_64 = arith.constant 0 : index
      %c0_65 = arith.constant 0 : index
      %83 = vector.load %arg4[%c0_64, %c0_65] : memref<128x256xbf16, #tpu.memory_space<vmem>>, vector<128x256xbf16>
      %cst_66 = arith.constant dense<0.000000e+00> : vector<128x256xf32>
      %84 = tpu.matmul %82, %83, %cst_66 {dimension_numbers = #tpu.dot_dimension_numbers<[1], [0], [0], [1], [0, 0, 1, 1], [], []>} : vector<128x128xbf16>, vector<128x256xbf16>, vector<128x256xf32> -> vector<128x256xf32>
      %85 = vector.extract_strided_slice %84 {offsets = [0, 0], sizes = [128, 128], strides = [1, 1]} : vector<128x256xf32> to vector<128x128xf32>
      %86 = arith.truncf %85 : vector<128x128xf32> to vector<128x128xbf16>
      %c0_67 = arith.constant 0 : index
      %c0_68 = arith.constant 0 : index
      %87 = vector.load %arg8[%c0_67, %c0_68] : memref<128x128xbf16, #tpu.memory_space<vmem>>, vector<128x128xbf16>
      tpu.vector_store %arg8[%c0_67, %c0_68], %86 {strides = array<i32>} : memref<128x128xbf16, #tpu.memory_space<vmem>>, vector<128x128xbf16>,
      %88 = vector.extract_strided_slice %84 {offsets = [0, 128], sizes = [128, 128], strides = [1, 1]} : vector<128x256xf32> to vector<128x128xf32>
      %89 = arith.truncf %88 : vector<128x128xf32> to vector<128x128xbf16>
      %c0_69 = arith.constant 0 : index
      %c0_70 = arith.constant 0 : index
      %90 = vector.load %arg9[%c0_69, %c0_70] : memref<128x128xbf16, #tpu.memory_space<vmem>>, vector<128x128xbf16>
      tpu.vector_store %arg9[%c0_69, %c0_70], %89 {strides = array<i32>} : memref<128x128xbf16, #tpu.memory_space<vmem>>, vector<128x128xbf16>,
    } else {
    }
    %c0 = arith.constant 0 : index
    %5 = arith.index_cast %1 : i32 to index
    %c0_1 = arith.constant 0 : index
    %6 = vector.load %arg2[%c0, %5, %c0_1] : memref<1x128x128xbf16, #tpu.memory_space<vmem>>, vector<1x32x128xbf16>
    %7 = vector.shape_cast %6 : vector<1x32x128xbf16> to vector<32x128xbf16>
    %c0_2 = arith.constant 0 : index
    %c0_3 = arith.constant 0 : index
    %8 = vector.load %arg3[%c0_2, %c0_3] : memref<128x128xbf16, #tpu.memory_space<vmem>>, vector<128x128xbf16>
    %cst = arith.constant dense<0.000000e+00> : vector<32x128xf32>
    %9 = tpu.matmul %7, %8, %cst {dimension_numbers = #tpu.dot_dimension_numbers<[1], [0], [0], [1], [0, 0, 1, 1], [], []>} : vector<32x128xbf16>, vector<128x128xbf16>, vector<32x128xf32> -> vector<32x128xf32>
    %cst_4 = arith.constant 0.0883883461 : f32
    %10 = vector.broadcast %cst_4 : f32 to vector<32x128xf32>
    %11 = arith.mulf %9, %10 : vector<32x128xf32>
    %12 = arith.truncf %11 : vector<32x128xf32> to vector<32x128xbf16>
    %cst_5 = arith.constant -1.000000e+30 : f32
    %13 = vector.broadcast %cst_5 : f32 to vector<4x32x1xf32>
    %c0_6 = arith.constant 0 : index
    %c0_7 = arith.constant 0 : index
    %c0_8 = arith.constant 0 : index
    %14 = vector.load %arg10[%c0_6, %c0_7, %c0_8] : memref<4x32x1xf32, #tpu.memory_space<vmem>>, vector<4x32x1xf32>
    tpu.vector_store %arg10[%c0_6, %c0_7, %c0_8], %13 {strides = array<i32>} : memref<4x32x1xf32, #tpu.memory_space<vmem>>, vector<4x32x1xf32>,
    %cst_9 = arith.constant 0.000000e+00 : f32
    %15 = vector.broadcast %cst_9 : f32 to vector<4x32x1xf32>
    %c0_10 = arith.constant 0 : index
    %c0_11 = arith.constant 0 : index
    %c0_12 = arith.constant 0 : index
    %16 = vector.load %arg11[%c0_10, %c0_11, %c0_12] : memref<4x32x1xf32, #tpu.memory_space<vmem>>, vector<4x32x1xf32>
    tpu.vector_store %arg11[%c0_10, %c0_11, %c0_12], %15 {strides = array<i32>} : memref<4x32x1xf32, #tpu.memory_space<vmem>>, vector<4x32x1xf32>,
    %cst_13 = arith.constant 0.000000e+00 : f32
    %17 = vector.broadcast %cst_13 : f32 to vector<4x32x32xf32>
    %c0_14 = arith.constant 0 : index
    %c0_15 = arith.constant 0 : index
    %c0_16 = arith.constant 0 : index
    %18 = vector.load %arg12[%c0_14, %c0_15, %c0_16] : memref<4x32x32xf32, #tpu.memory_space<vmem>>, vector<4x32x32xf32>
    tpu.vector_store %arg12[%c0_14, %c0_15, %c0_16], %17 {strides = array<i32>} : memref<4x32x32xf32, #tpu.memory_space<vmem>>, vector<4x32x32xf32>,
    %19 = tpu.iota {dimensions = array<i32: 0>} : vector<32x32xi32>
    %20 = vector.broadcast %1 : i32 to vector<32x32xi32>
    %21 = arith.addi %20, %19 : vector<32x32xi32>
    %22 = tpu.iota {dimensions = array<i32: 1>} : vector<32x32xi32>
    %c1_i32 = arith.constant 1 : i32
    %23 = arith.addi %arg1, %c1_i32 : i32
    %c0_i32_17 = arith.constant 0 : i32
    %24 = arith.subi %23, %c0_i32_17 : i32
    %c1_i32_18 = arith.constant 1 : i32
    %c1_i32_19 = arith.constant 1 : i32
    %25 = arith.subi %c1_i32_18, %c1_i32_19 : i32
    %26 = arith.addi %24, %25 : i32
    %c1_i32_20 = arith.constant 1 : i32
    %27 = arith.divsi %26, %c1_i32_20 : i32
    %c1_i32_21 = arith.constant 1 : i32
    %c0_i32_22 = arith.constant 0 : i32
    %c0_i32_23 = arith.constant 0 : i32
    %28 = arith.subi %27, %c0_i32_23 : i32
    %29 = arith.addi %c0_i32_23, %28 : i32
    %c1_i32_24 = arith.constant 1 : i32
    scf.for %arg13 = %c0_i32_23 to %29 step %c1_i32_24  : i32 {
      %81 = arith.muli %arg13, %c1_i32_21 : i32
      %82 = arith.addi %c0_i32_22, %81 : i32
      %c32_i32_61 = arith.constant 32 : i32
      %83 = arith.muli %82, %c32_i32_61 : i32
      %84 = tpu.assume_multiple %83, 32 : i32
      %85 = arith.index_cast %84 : i32 to index
      %c0_62 = arith.constant 0 : index
      %86 = vector.load %arg8[%85, %c0_62] : memref<128x128xbf16, #tpu.memory_space<vmem>>, vector<32x128xbf16>
      %87 = arith.index_cast %84 : i32 to index
      %c0_63 = arith.constant 0 : index
      %88 = vector.load %arg9[%87, %c0_63] : memref<128x128xbf16, #tpu.memory_space<vmem>>, vector<32x128xbf16>
      %89 = vector.broadcast %84 : i32 to vector<32x32xi32>
      %90 = arith.addi %89, %22 : vector<32x32xi32>
      %91 = arith.cmpi sge, %21, %90 : vector<32x32xi32>
      %92 = vector.extract_strided_slice %12 {offsets = [0, 0], sizes = [32, 32], strides = [1, 1]} : vector<32x128xbf16> to vector<32x32xbf16>
      %93 = vector.extract_strided_slice %86 {offsets = [0, 0], sizes = [32, 32], strides = [1, 1]} : vector<32x128xbf16> to vector<32x32xbf16>
      %cst_64 = arith.constant dense<0.000000e+00> : vector<32x32xf32>
      %94 = tpu.matmul %92, %93, %cst_64 {dimension_numbers = #tpu.dot_dimension_numbers<[1], [1], [0], [0], [0, 0, 1, 0], [], []>} : vector<32x32xbf16>, vector<32x32xbf16>, vector<32x32xf32> -> vector<32x32xf32>
      %cst_65 = arith.constant -1.000000e+30 : f32
      %95 = vector.broadcast %cst_65 : f32 to vector<32x32xf32>
      %96 = arith.select %91, %94, %95 : vector<32x32xi1>, vector<32x32xf32>
      %c0_66 = arith.constant 0 : index
      %c0_67 = arith.constant 0 : index
      %c0_68 = arith.constant 0 : index
      %97 = vector.load %arg10[%c0_66, %c0_67, %c0_68] : memref<4x32x1xf32, #tpu.memory_space<vmem>>, vector<1x32x1xf32>
      %98 = vector.shape_cast %97 : vector<1x32x1xf32> to vector<32x1xf32>
      %cst_69 = arith.constant dense<0xFF800000> : vector<32xf32>
      %99 = vector.multi_reduction <maximumf>, %96, %cst_69 [1] : vector<32x32xf32> to vector<32xf32>
      %100 = vector.shape_cast %99 : vector<32xf32> to vector<32x1xf32>
      %101 = arith.maximumf %98, %100 : vector<32x1xf32>
      %102 = arith.subf %98, %101 : vector<32x1xf32>
      %103 = math.exp %102 : vector<32x1xf32>
      %104 = vector.broadcast %101 : vector<32x1xf32> to vector<32x32xf32>
      %105 = arith.subf %96, %104 : vector<32x32xf32>
      %106 = math.exp %105 : vector<32x32xf32>
      %c0_70 = arith.constant 0 : index
      %c0_71 = arith.constant 0 : index
      %c0_72 = arith.constant 0 : index
      %107 = vector.load %arg11[%c0_70, %c0_71, %c0_72] : memref<4x32x1xf32, #tpu.memory_space<vmem>>, vector<1x32x1xf32>
      %108 = vector.shape_cast %107 : vector<1x32x1xf32> to vector<32x1xf32>
      %109 = arith.mulf %103, %108 : vector<32x1xf32>
      %cst_73 = arith.constant dense<0.000000e+00> : vector<32xf32>
      %110 = vector.multi_reduction <add>, %106, %cst_73 [1] : vector<32x32xf32> to vector<32xf32>
      %111 = vector.shape_cast %110 : vector<32xf32> to vector<32x1xf32>
      %112 = arith.addf %109, %111 : vector<32x1xf32>
      %c0_74 = arith.constant 0 : index
      %c0_75 = arith.constant 0 : index
      %c0_76 = arith.constant 0 : index
      %113 = vector.load %arg11[%c0_74, %c0_75, %c0_76] : memref<4x32x1xf32, #tpu.memory_space<vmem>>, vector<1x32x1xf32>
      %114 = vector.shape_cast %113 : vector<1x32x1xf32> to vector<32x1xf32>
      %115 = vector.shape_cast %112 : vector<32x1xf32> to vector<1x32x1xf32>
      tpu.vector_store %arg11[%c0_74, %c0_75, %c0_76], %115 {strides = array<i32>} : memref<4x32x1xf32, #tpu.memory_space<vmem>>, vector<1x32x1xf32>,
      %c0_77 = arith.constant 0 : index
      %c0_78 = arith.constant 0 : index
      %c0_79 = arith.constant 0 : index
      %116 = vector.load %arg12[%c0_77, %c0_78, %c0_79] : memref<4x32x32xf32, #tpu.memory_space<vmem>>, vector<1x32x32xf32>
      %117 = vector.shape_cast %116 : vector<1x32x32xf32> to vector<32x32xf32>
      %118 = vector.broadcast %103 : vector<32x1xf32> to vector<32x32xf32>
      %119 = arith.mulf %118, %117 : vector<32x32xf32>
      %120 = arith.truncf %106 : vector<32x32xf32> to vector<32x32xbf16>
      %121 = vector.extract_strided_slice %88 {offsets = [0, 0], sizes = [32, 32], strides = [1, 1]} : vector<32x128xbf16> to vector<32x32xbf16>
      %cst_80 = arith.constant dense<0.000000e+00> : vector<32x32xf32>
      %122 = tpu.matmul %120, %121, %cst_80 {dimension_numbers = #tpu.dot_dimension_numbers<[1], [0], [0], [1], [0, 0, 1, 1], [], []>} : vector<32x32xbf16>, vector<32x32xbf16>, vector<32x32xf32> -> vector<32x32xf32>
      %123 = arith.addf %119, %122 : vector<32x32xf32>
      %c0_81 = arith.constant 0 : index
      %c0_82 = arith.constant 0 : index
      %c0_83 = arith.constant 0 : index
      %124 = vector.load %arg12[%c0_81, %c0_82, %c0_83] : memref<4x32x32xf32, #tpu.memory_space<vmem>>, vector<1x32x32xf32>
      %125 = vector.shape_cast %124 : vector<1x32x32xf32> to vector<32x32xf32>
      %126 = vector.shape_cast %123 : vector<32x32xf32> to vector<1x32x32xf32>
      tpu.vector_store %arg12[%c0_81, %c0_82, %c0_83], %126 {strides = array<i32>} : memref<4x32x32xf32, #tpu.memory_space<vmem>>, vector<1x32x32xf32>,
      %c0_84 = arith.constant 0 : index
      %c0_85 = arith.constant 0 : index
      %c0_86 = arith.constant 0 : index
      %127 = vector.load %arg10[%c0_84, %c0_85, %c0_86] : memref<4x32x1xf32, #tpu.memory_space<vmem>>, vector<1x32x1xf32>
      %128 = vector.shape_cast %127 : vector<1x32x1xf32> to vector<32x1xf32>
      %129 = vector.shape_cast %101 : vector<32x1xf32> to vector<1x32x1xf32>
      tpu.vector_store %arg10[%c0_84, %c0_85, %c0_86], %129 {strides = array<i32>} : memref<4x32x1xf32, #tpu.memory_space<vmem>>, vector<1x32x1xf32>,
      %130 = vector.extract_strided_slice %12 {offsets = [0, 32], sizes = [32, 32], strides = [1, 1]} : vector<32x128xbf16> to vector<32x32xbf16>
      %131 = vector.extract_strided_slice %86 {offsets = [0, 32], sizes = [32, 32], strides = [1, 1]} : vector<32x128xbf16> to vector<32x32xbf16>
      %cst_87 = arith.constant dense<0.000000e+00> : vector<32x32xf32>
      %132 = tpu.matmul %130, %131, %cst_87 {dimension_numbers = #tpu.dot_dimension_numbers<[1], [1], [0], [0], [0, 0, 1, 0], [], []>} : vector<32x32xbf16>, vector<32x32xbf16>, vector<32x32xf32> -> vector<32x32xf32>
      %cst_88 = arith.constant -1.000000e+30 : f32
      %133 = vector.broadcast %cst_88 : f32 to vector<32x32xf32>
      %134 = arith.select %91, %132, %133 : vector<32x32xi1>, vector<32x32xf32>
      %c1_89 = arith.constant 1 : index
      %c0_90 = arith.constant 0 : index
      %c0_91 = arith.constant 0 : index
      %135 = vector.load %arg10[%c1_89, %c0_90, %c0_91] : memref<4x32x1xf32, #tpu.memory_space<vmem>>, vector<1x32x1xf32>
      %136 = vector.shape_cast %135 : vector<1x32x1xf32> to vector<32x1xf32>
      %cst_92 = arith.constant dense<0xFF800000> : vector<32xf32>
      %137 = vector.multi_reduction <maximumf>, %134, %cst_92 [1] : vector<32x32xf32> to vector<32xf32>
      %138 = vector.shape_cast %137 : vector<32xf32> to vector<32x1xf32>
      %139 = arith.maximumf %136, %138 : vector<32x1xf32>
      %140 = arith.subf %136, %139 : vector<32x1xf32>
      %141 = math.exp %140 : vector<32x1xf32>
      %142 = vector.broadcast %139 : vector<32x1xf32> to vector<32x32xf32>
      %143 = arith.subf %134, %142 : vector<32x32xf32>
      %144 = math.exp %143 : vector<32x32xf32>
      %c1_93 = arith.constant 1 : index
      %c0_94 = arith.constant 0 : index
      %c0_95 = arith.constant 0 : index
      %145 = vector.load %arg11[%c1_93, %c0_94, %c0_95] : memref<4x32x1xf32, #tpu.memory_space<vmem>>, vector<1x32x1xf32>
      %146 = vector.shape_cast %145 : vector<1x32x1xf32> to vector<32x1xf32>
      %147 = arith.mulf %141, %146 : vector<32x1xf32>
      %cst_96 = arith.constant dense<0.000000e+00> : vector<32xf32>
      %148 = vector.multi_reduction <add>, %144, %cst_96 [1] : vector<32x32xf32> to vector<32xf32>
      %149 = vector.shape_cast %148 : vector<32xf32> to vector<32x1xf32>
      %150 = arith.addf %147, %149 : vector<32x1xf32>
      %c1_97 = arith.constant 1 : index
      %c0_98 = arith.constant 0 : index
      %c0_99 = arith.constant 0 : index
      %151 = vector.load %arg11[%c1_97, %c0_98, %c0_99] : memref<4x32x1xf32, #tpu.memory_space<vmem>>, vector<1x32x1xf32>
      %152 = vector.shape_cast %151 : vector<1x32x1xf32> to vector<32x1xf32>
      %153 = vector.shape_cast %150 : vector<32x1xf32> to vector<1x32x1xf32>
      tpu.vector_store %arg11[%c1_97, %c0_98, %c0_99], %153 {strides = array<i32>} : memref<4x32x1xf32, #tpu.memory_space<vmem>>, vector<1x32x1xf32>,
      %c1_100 = arith.constant 1 : index
      %c0_101 = arith.constant 0 : index
      %c0_102 = arith.constant 0 : index
      %154 = vector.load %arg12[%c1_100, %c0_101, %c0_102] : memref<4x32x32xf32, #tpu.memory_space<vmem>>, vector<1x32x32xf32>
      %155 = vector.shape_cast %154 : vector<1x32x32xf32> to vector<32x32xf32>
      %156 = vector.broadcast %141 : vector<32x1xf32> to vector<32x32xf32>
      %157 = arith.mulf %156, %155 : vector<32x32xf32>
      %158 = arith.truncf %144 : vector<32x32xf32> to vector<32x32xbf16>
      %159 = vector.extract_strided_slice %88 {offsets = [0, 32], sizes = [32, 32], strides = [1, 1]} : vector<32x128xbf16> to vector<32x32xbf16>
      %cst_103 = arith.constant dense<0.000000e+00> : vector<32x32xf32>
      %160 = tpu.matmul %158, %159, %cst_103 {dimension_numbers = #tpu.dot_dimension_numbers<[1], [0], [0], [1], [0, 0, 1, 1], [], []>} : vector<32x32xbf16>, vector<32x32xbf16>, vector<32x32xf32> -> vector<32x32xf32>
      %161 = arith.addf %157, %160 : vector<32x32xf32>
      %c1_104 = arith.constant 1 : index
      %c0_105 = arith.constant 0 : index
      %c0_106 = arith.constant 0 : index
      %162 = vector.load %arg12[%c1_104, %c0_105, %c0_106] : memref<4x32x32xf32, #tpu.memory_space<vmem>>, vector<1x32x32xf32>
      %163 = vector.shape_cast %162 : vector<1x32x32xf32> to vector<32x32xf32>
      %164 = vector.shape_cast %161 : vector<32x32xf32> to vector<1x32x32xf32>
      tpu.vector_store %arg12[%c1_104, %c0_105, %c0_106], %164 {strides = array<i32>} : memref<4x32x32xf32, #tpu.memory_space<vmem>>, vector<1x32x32xf32>,
      %c1_107 = arith.constant 1 : index
      %c0_108 = arith.constant 0 : index
      %c0_109 = arith.constant 0 : index
      %165 = vector.load %arg10[%c1_107, %c0_108, %c0_109] : memref<4x32x1xf32, #tpu.memory_space<vmem>>, vector<1x32x1xf32>
      %166 = vector.shape_cast %165 : vector<1x32x1xf32> to vector<32x1xf32>
      %167 = vector.shape_cast %139 : vector<32x1xf32> to vector<1x32x1xf32>
      tpu.vector_store %arg10[%c1_107, %c0_108, %c0_109], %167 {strides = array<i32>} : memref<4x32x1xf32, #tpu.memory_space<vmem>>, vector<1x32x1xf32>,
      %168 = vector.extract_strided_slice %12 {offsets = [0, 64], sizes = [32, 32], strides = [1, 1]} : vector<32x128xbf16> to vector<32x32xbf16>
      %169 = vector.extract_strided_slice %86 {offsets = [0, 64], sizes = [32, 32], strides = [1, 1]} : vector<32x128xbf16> to vector<32x32xbf16>
      %cst_110 = arith.constant dense<0.000000e+00> : vector<32x32xf32>
      %170 = tpu.matmul %168, %169, %cst_110 {dimension_numbers = #tpu.dot_dimension_numbers<[1], [1], [0], [0], [0, 0, 1, 0], [], []>} : vector<32x32xbf16>, vector<32x32xbf16>, vector<32x32xf32> -> vector<32x32xf32>
      %cst_111 = arith.constant -1.000000e+30 : f32
      %171 = vector.broadcast %cst_111 : f32 to vector<32x32xf32>
      %172 = arith.select %91, %170, %171 : vector<32x32xi1>, vector<32x32xf32>
      %c2_112 = arith.constant 2 : index
      %c0_113 = arith.constant 0 : index
      %c0_114 = arith.constant 0 : index
      %173 = vector.load %arg10[%c2_112, %c0_113, %c0_114] : memref<4x32x1xf32, #tpu.memory_space<vmem>>, vector<1x32x1xf32>
      %174 = vector.shape_cast %173 : vector<1x32x1xf32> to vector<32x1xf32>
      %cst_115 = arith.constant dense<0xFF800000> : vector<32xf32>
      %175 = vector.multi_reduction <maximumf>, %172, %cst_115 [1] : vector<32x32xf32> to vector<32xf32>
      %176 = vector.shape_cast %175 : vector<32xf32> to vector<32x1xf32>
      %177 = arith.maximumf %174, %176 : vector<32x1xf32>
      %178 = arith.subf %174, %177 : vector<32x1xf32>
      %179 = math.exp %178 : vector<32x1xf32>
      %180 = vector.broadcast %177 : vector<32x1xf32> to vector<32x32xf32>
      %181 = arith.subf %172, %180 : vector<32x32xf32>
      %182 = math.exp %181 : vector<32x32xf32>
      %c2_116 = arith.constant 2 : index
      %c0_117 = arith.constant 0 : index
      %c0_118 = arith.constant 0 : index
      %183 = vector.load %arg11[%c2_116, %c0_117, %c0_118] : memref<4x32x1xf32, #tpu.memory_space<vmem>>, vector<1x32x1xf32>
      %184 = vector.shape_cast %183 : vector<1x32x1xf32> to vector<32x1xf32>
      %185 = arith.mulf %179, %184 : vector<32x1xf32>
      %cst_119 = arith.constant dense<0.000000e+00> : vector<32xf32>
      %186 = vector.multi_reduction <add>, %182, %cst_119 [1] : vector<32x32xf32> to vector<32xf32>
      %187 = vector.shape_cast %186 : vector<32xf32> to vector<32x1xf32>
      %188 = arith.addf %185, %187 : vector<32x1xf32>
      %c2_120 = arith.constant 2 : index
      %c0_121 = arith.constant 0 : index
      %c0_122 = arith.constant 0 : index
      %189 = vector.load %arg11[%c2_120, %c0_121, %c0_122] : memref<4x32x1xf32, #tpu.memory_space<vmem>>, vector<1x32x1xf32>
      %190 = vector.shape_cast %189 : vector<1x32x1xf32> to vector<32x1xf32>
      %191 = vector.shape_cast %188 : vector<32x1xf32> to vector<1x32x1xf32>
      tpu.vector_store %arg11[%c2_120, %c0_121, %c0_122], %191 {strides = array<i32>} : memref<4x32x1xf32, #tpu.memory_space<vmem>>, vector<1x32x1xf32>,
      %c2_123 = arith.constant 2 : index
      %c0_124 = arith.constant 0 : index
      %c0_125 = arith.constant 0 : index
      %192 = vector.load %arg12[%c2_123, %c0_124, %c0_125] : memref<4x32x32xf32, #tpu.memory_space<vmem>>, vector<1x32x32xf32>
      %193 = vector.shape_cast %192 : vector<1x32x32xf32> to vector<32x32xf32>
      %194 = vector.broadcast %179 : vector<32x1xf32> to vector<32x32xf32>
      %195 = arith.mulf %194, %193 : vector<32x32xf32>
      %196 = arith.truncf %182 : vector<32x32xf32> to vector<32x32xbf16>
      %197 = vector.extract_strided_slice %88 {offsets = [0, 64], sizes = [32, 32], strides = [1, 1]} : vector<32x128xbf16> to vector<32x32xbf16>
      %cst_126 = arith.constant dense<0.000000e+00> : vector<32x32xf32>
      %198 = tpu.matmul %196, %197, %cst_126 {dimension_numbers = #tpu.dot_dimension_numbers<[1], [0], [0], [1], [0, 0, 1, 1], [], []>} : vector<32x32xbf16>, vector<32x32xbf16>, vector<32x32xf32> -> vector<32x32xf32>
      %199 = arith.addf %195, %198 : vector<32x32xf32>
      %c2_127 = arith.constant 2 : index
      %c0_128 = arith.constant 0 : index
      %c0_129 = arith.constant 0 : index
      %200 = vector.load %arg12[%c2_127, %c0_128, %c0_129] : memref<4x32x32xf32, #tpu.memory_space<vmem>>, vector<1x32x32xf32>
      %201 = vector.shape_cast %200 : vector<1x32x32xf32> to vector<32x32xf32>
      %202 = vector.shape_cast %199 : vector<32x32xf32> to vector<1x32x32xf32>
      tpu.vector_store %arg12[%c2_127, %c0_128, %c0_129], %202 {strides = array<i32>} : memref<4x32x32xf32, #tpu.memory_space<vmem>>, vector<1x32x32xf32>,
      %c2_130 = arith.constant 2 : index
      %c0_131 = arith.constant 0 : index
      %c0_132 = arith.constant 0 : index
      %203 = vector.load %arg10[%c2_130, %c0_131, %c0_132] : memref<4x32x1xf32, #tpu.memory_space<vmem>>, vector<1x32x1xf32>
      %204 = vector.shape_cast %203 : vector<1x32x1xf32> to vector<32x1xf32>
      %205 = vector.shape_cast %177 : vector<32x1xf32> to vector<1x32x1xf32>
      tpu.vector_store %arg10[%c2_130, %c0_131, %c0_132], %205 {strides = array<i32>} : memref<4x32x1xf32, #tpu.memory_space<vmem>>, vector<1x32x1xf32>,
      %206 = vector.extract_strided_slice %12 {offsets = [0, 96], sizes = [32, 32], strides = [1, 1]} : vector<32x128xbf16> to vector<32x32xbf16>
      %207 = vector.extract_strided_slice %86 {offsets = [0, 96], sizes = [32, 32], strides = [1, 1]} : vector<32x128xbf16> to vector<32x32xbf16>
      %cst_133 = arith.constant dense<0.000000e+00> : vector<32x32xf32>
      %208 = tpu.matmul %206, %207, %cst_133 {dimension_numbers = #tpu.dot_dimension_numbers<[1], [1], [0], [0], [0, 0, 1, 0], [], []>} : vector<32x32xbf16>, vector<32x32xbf16>, vector<32x32xf32> -> vector<32x32xf32>
      %cst_134 = arith.constant -1.000000e+30 : f32
      %209 = vector.broadcast %cst_134 : f32 to vector<32x32xf32>
      %210 = arith.select %91, %208, %209 : vector<32x32xi1>, vector<32x32xf32>
      %c3_135 = arith.constant 3 : index
      %c0_136 = arith.constant 0 : index
      %c0_137 = arith.constant 0 : index
      %211 = vector.load %arg10[%c3_135, %c0_136, %c0_137] : memref<4x32x1xf32, #tpu.memory_space<vmem>>, vector<1x32x1xf32>
      %212 = vector.shape_cast %211 : vector<1x32x1xf32> to vector<32x1xf32>
      %cst_138 = arith.constant dense<0xFF800000> : vector<32xf32>
      %213 = vector.multi_reduction <maximumf>, %210, %cst_138 [1] : vector<32x32xf32> to vector<32xf32>
      %214 = vector.shape_cast %213 : vector<32xf32> to vector<32x1xf32>
      %215 = arith.maximumf %212, %214 : vector<32x1xf32>
      %216 = arith.subf %212, %215 : vector<32x1xf32>
      %217 = math.exp %216 : vector<32x1xf32>
      %218 = vector.broadcast %215 : vector<32x1xf32> to vector<32x32xf32>
      %219 = arith.subf %210, %218 : vector<32x32xf32>
      %220 = math.exp %219 : vector<32x32xf32>
      %c3_139 = arith.constant 3 : index
      %c0_140 = arith.constant 0 : index
      %c0_141 = arith.constant 0 : index
      %221 = vector.load %arg11[%c3_139, %c0_140, %c0_141] : memref<4x32x1xf32, #tpu.memory_space<vmem>>, vector<1x32x1xf32>
      %222 = vector.shape_cast %221 : vector<1x32x1xf32> to vector<32x1xf32>
      %223 = arith.mulf %217, %222 : vector<32x1xf32>
      %cst_142 = arith.constant dense<0.000000e+00> : vector<32xf32>
      %224 = vector.multi_reduction <add>, %220, %cst_142 [1] : vector<32x32xf32> to vector<32xf32>
      %225 = vector.shape_cast %224 : vector<32xf32> to vector<32x1xf32>
      %226 = arith.addf %223, %225 : vector<32x1xf32>
      %c3_143 = arith.constant 3 : index
      %c0_144 = arith.constant 0 : index
      %c0_145 = arith.constant 0 : index
      %227 = vector.load %arg11[%c3_143, %c0_144, %c0_145] : memref<4x32x1xf32, #tpu.memory_space<vmem>>, vector<1x32x1xf32>
      %228 = vector.shape_cast %227 : vector<1x32x1xf32> to vector<32x1xf32>
      %229 = vector.shape_cast %226 : vector<32x1xf32> to vector<1x32x1xf32>
      tpu.vector_store %arg11[%c3_143, %c0_144, %c0_145], %229 {strides = array<i32>} : memref<4x32x1xf32, #tpu.memory_space<vmem>>, vector<1x32x1xf32>,
      %c3_146 = arith.constant 3 : index
      %c0_147 = arith.constant 0 : index
      %c0_148 = arith.constant 0 : index
      %230 = vector.load %arg12[%c3_146, %c0_147, %c0_148] : memref<4x32x32xf32, #tpu.memory_space<vmem>>, vector<1x32x32xf32>
      %231 = vector.shape_cast %230 : vector<1x32x32xf32> to vector<32x32xf32>
      %232 = vector.broadcast %217 : vector<32x1xf32> to vector<32x32xf32>
      %233 = arith.mulf %232, %231 : vector<32x32xf32>
      %234 = arith.truncf %220 : vector<32x32xf32> to vector<32x32xbf16>
      %235 = vector.extract_strided_slice %88 {offsets = [0, 96], sizes = [32, 32], strides = [1, 1]} : vector<32x128xbf16> to vector<32x32xbf16>
      %cst_149 = arith.constant dense<0.000000e+00> : vector<32x32xf32>
      %236 = tpu.matmul %234, %235, %cst_149 {dimension_numbers = #tpu.dot_dimension_numbers<[1], [0], [0], [1], [0, 0, 1, 1], [], []>} : vector<32x32xbf16>, vector<32x32xbf16>, vector<32x32xf32> -> vector<32x32xf32>
      %237 = arith.addf %233, %236 : vector<32x32xf32>
      %c3_150 = arith.constant 3 : index
      %c0_151 = arith.constant 0 : index
      %c0_152 = arith.constant 0 : index
      %238 = vector.load %arg12[%c3_150, %c0_151, %c0_152] : memref<4x32x32xf32, #tpu.memory_space<vmem>>, vector<1x32x32xf32>
      %239 = vector.shape_cast %238 : vector<1x32x32xf32> to vector<32x32xf32>
      %240 = vector.shape_cast %237 : vector<32x32xf32> to vector<1x32x32xf32>
      tpu.vector_store %arg12[%c3_150, %c0_151, %c0_152], %240 {strides = array<i32>} : memref<4x32x32xf32, #tpu.memory_space<vmem>>, vector<1x32x32xf32>,
      %c3_153 = arith.constant 3 : index
      %c0_154 = arith.constant 0 : index
      %c0_155 = arith.constant 0 : index
      %241 = vector.load %arg10[%c3_153, %c0_154, %c0_155] : memref<4x32x1xf32, #tpu.memory_space<vmem>>, vector<1x32x1xf32>
      %242 = vector.shape_cast %241 : vector<1x32x1xf32> to vector<32x1xf32>
      %243 = vector.shape_cast %215 : vector<32x1xf32> to vector<1x32x1xf32>
      tpu.vector_store %arg10[%c3_153, %c0_154, %c0_155], %243 {strides = array<i32>} : memref<4x32x1xf32, #tpu.memory_space<vmem>>, vector<1x32x1xf32>,
    }
    %cst_25 = arith.constant 0.000000e+00 : f32
    %30 = vector.broadcast %cst_25 : f32 to vector<32x128xf32>
    %c0_26 = arith.constant 0 : index
    %c0_27 = arith.constant 0 : index
    %c0_28 = arith.constant 0 : index
    %31 = vector.load %arg12[%c0_26, %c0_27, %c0_28] : memref<4x32x32xf32, #tpu.memory_space<vmem>>, vector<1x32x32xf32>
    %32 = vector.shape_cast %31 : vector<1x32x32xf32> to vector<32x32xf32>
    %c0_29 = arith.constant 0 : index
    %c0_30 = arith.constant 0 : index
    %c0_31 = arith.constant 0 : index
    %33 = vector.load %arg11[%c0_29, %c0_30, %c0_31] : memref<4x32x1xf32, #tpu.memory_space<vmem>>, vector<1x32x1xf32>
    %34 = vector.shape_cast %33 : vector<1x32x1xf32> to vector<32x1xf32>
    %35 = tpu.reciprocal %34 {approx = true} : vector<32x1xf32> -> vector<32x1xf32>
    %36 = vector.broadcast %35 : vector<32x1xf32> to vector<32x32xf32>
    %37 = arith.mulf %32, %36 : vector<32x32xf32>
    %38 = arith.truncf %37 : vector<32x32xf32> to vector<32x32xbf16>
    %c0_32 = arith.constant 0 : index
    %c0_33 = arith.constant 0 : index
    %39 = vector.load %arg5[%c0_32, %c0_33] : memref<128x128xbf16, #tpu.memory_space<vmem>>, vector<32x128xbf16>
    %cst_34 = arith.constant dense<0.000000e+00> : vector<32x128xf32>
    %40 = tpu.matmul %38, %39, %cst_34 {dimension_numbers = #tpu.dot_dimension_numbers<[1], [0], [0], [1], [0, 0, 1, 1], [], []>} : vector<32x32xbf16>, vector<32x128xbf16>, vector<32x128xf32> -> vector<32x128xf32>
    %41 = arith.addf %30, %40 : vector<32x128xf32>
    %c1 = arith.constant 1 : index
    %c0_35 = arith.constant 0 : index
    %c0_36 = arith.constant 0 : index
    %42 = vector.load %arg12[%c1, %c0_35, %c0_36] : memref<4x32x32xf32, #tpu.memory_space<vmem>>, vector<1x32x32xf32>
    %43 = vector.shape_cast %42 : vector<1x32x32xf32> to vector<32x32xf32>
    %c1_37 = arith.constant 1 : index
    %c0_38 = arith.constant 0 : index
    %c0_39 = arith.constant 0 : index
    %44 = vector.load %arg11[%c1_37, %c0_38, %c0_39] : memref<4x32x1xf32, #tpu.memory_space<vmem>>, vector<1x32x1xf32>
    %45 = vector.shape_cast %44 : vector<1x32x1xf32> to vector<32x1xf32>
    %46 = tpu.reciprocal %45 {approx = true} : vector<32x1xf32> -> vector<32x1xf32>
    %47 = vector.broadcast %46 : vector<32x1xf32> to vector<32x32xf32>
    %48 = arith.mulf %43, %47 : vector<32x32xf32>
    %49 = arith.truncf %48 : vector<32x32xf32> to vector<32x32xbf16>
    %c32 = arith.constant 32 : index
    %c0_40 = arith.constant 0 : index
    %50 = vector.load %arg5[%c32, %c0_40] : memref<128x128xbf16, #tpu.memory_space<vmem>>, vector<32x128xbf16>
    %cst_41 = arith.constant dense<0.000000e+00> : vector<32x128xf32>
    %51 = tpu.matmul %49, %50, %cst_41 {dimension_numbers = #tpu.dot_dimension_numbers<[1], [0], [0], [1], [0, 0, 1, 1], [], []>} : vector<32x32xbf16>, vector<32x128xbf16>, vector<32x128xf32> -> vector<32x128xf32>
    %52 = arith.addf %41, %51 : vector<32x128xf32>
    %c2 = arith.constant 2 : index
    %c0_42 = arith.constant 0 : index
    %c0_43 = arith.constant 0 : index
    %53 = vector.load %arg12[%c2, %c0_42, %c0_43] : memref<4x32x32xf32, #tpu.memory_space<vmem>>, vector<1x32x32xf32>
    %54 = vector.shape_cast %53 : vector<1x32x32xf32> to vector<32x32xf32>
    %c2_44 = arith.constant 2 : index
    %c0_45 = arith.constant 0 : index
    %c0_46 = arith.constant 0 : index
    %55 = vector.load %arg11[%c2_44, %c0_45, %c0_46] : memref<4x32x1xf32, #tpu.memory_space<vmem>>, vector<1x32x1xf32>
    %56 = vector.shape_cast %55 : vector<1x32x1xf32> to vector<32x1xf32>
    %57 = tpu.reciprocal %56 {approx = true} : vector<32x1xf32> -> vector<32x1xf32>
    %58 = vector.broadcast %57 : vector<32x1xf32> to vector<32x32xf32>
    %59 = arith.mulf %54, %58 : vector<32x32xf32>
    %60 = arith.truncf %59 : vector<32x32xf32> to vector<32x32xbf16>
    %c64 = arith.constant 64 : index
    %c0_47 = arith.constant 0 : index
    %61 = vector.load %arg5[%c64, %c0_47] : memref<128x128xbf16, #tpu.memory_space<vmem>>, vector<32x128xbf16>
    %cst_48 = arith.constant dense<0.000000e+00> : vector<32x128xf32>
    %62 = tpu.matmul %60, %61, %cst_48 {dimension_numbers = #tpu.dot_dimension_numbers<[1], [0], [0], [1], [0, 0, 1, 1], [], []>} : vector<32x32xbf16>, vector<32x128xbf16>, vector<32x128xf32> -> vector<32x128xf32>
    %63 = arith.addf %52, %62 : vector<32x128xf32>
    %c3 = arith.constant 3 : index
    %c0_49 = arith.constant 0 : index
    %c0_50 = arith.constant 0 : index
    %64 = vector.load %arg12[%c3, %c0_49, %c0_50] : memref<4x32x32xf32, #tpu.memory_space<vmem>>, vector<1x32x32xf32>
    %65 = vector.shape_cast %64 : vector<1x32x32xf32> to vector<32x32xf32>
    %c3_51 = arith.constant 3 : index
    %c0_52 = arith.constant 0 : index
    %c0_53 = arith.constant 0 : index
    %66 = vector.load %arg11[%c3_51, %c0_52, %c0_53] : memref<4x32x1xf32, #tpu.memory_space<vmem>>, vector<1x32x1xf32>
    %67 = vector.shape_cast %66 : vector<1x32x1xf32> to vector<32x1xf32>
    %68 = tpu.reciprocal %67 {approx = true} : vector<32x1xf32> -> vector<32x1xf32>
    %69 = vector.broadcast %68 : vector<32x1xf32> to vector<32x32xf32>
    %70 = arith.mulf %65, %69 : vector<32x32xf32>
    %71 = arith.truncf %70 : vector<32x32xf32> to vector<32x32xbf16>
    %c96 = arith.constant 96 : index
    %c0_54 = arith.constant 0 : index
    %72 = vector.load %arg5[%c96, %c0_54] : memref<128x128xbf16, #tpu.memory_space<vmem>>, vector<32x128xbf16>
    %cst_55 = arith.constant dense<0.000000e+00> : vector<32x128xf32>
    %73 = tpu.matmul %71, %72, %cst_55 {dimension_numbers = #tpu.dot_dimension_numbers<[1], [0], [0], [1], [0, 0, 1, 1], [], []>} : vector<32x32xbf16>, vector<32x128xbf16>, vector<32x128xf32> -> vector<32x128xf32>
    %74 = arith.addf %63, %73 : vector<32x128xf32>
    %c0_56 = arith.constant 0 : index
    %c0_57 = arith.constant 0 : index
    %75 = vector.load %arg6[%c0_56, %c0_57] : memref<1x128xf32, #tpu.memory_space<vmem>>, vector<1x128xf32>
    %76 = vector.broadcast %75 : vector<1x128xf32> to vector<32x128xf32>
    %77 = arith.addf %74, %76 : vector<32x128xf32>
    %c0_58 = arith.constant 0 : index
    %c0_59 = arith.constant 0 : index
    %c0_60 = arith.constant 0 : index
    %78 = vector.load %arg7[%c0_58, %c0_59, %c0_60] : memref<1x32x128xf32, #tpu.memory_space<vmem>>, vector<1x32x128xf32>
    %79 = vector.shape_cast %78 : vector<1x32x128xf32> to vector<32x128xf32>
    %80 = vector.shape_cast %77 : vector<32x128xf32> to vector<1x32x128xf32>
    tpu.vector_store %arg7[%c0_58, %c0_59, %c0_60], %80 {strides = array<i32>} : memref<1x32x128xf32, #tpu.memory_space<vmem>>, vector<1x32x128xf32>,
    return
  }
  func.func @transform_0(%arg0: i32, %arg1: i32) -> (i32, i32, i32) {
    %c0_i32 = arith.constant 0 : i32
    %c0_i32_0 = arith.constant 0 : i32
    %c0_i32_1 = arith.constant 0 : i32
    return %arg0, %c0_i32, %c0_i32_0 : i32, i32, i32
  }
  func.func @transform_1(%arg0: i32, %arg1: i32) -> (i32, i32) {
    %c0_i32 = arith.constant 0 : i32
    %c0_i32_0 = arith.constant 0 : i32
    %c0_i32_1 = arith.constant 0 : i32
    return %c0_i32, %c0_i32_0 : i32, i32
  }
  func.func @transform_2(%arg0: i32, %arg1: i32) -> (i32, i32) {
    %c0_i32 = arith.constant 0 : i32
    %c0_i32_0 = arith.constant 0 : i32
    %c0_i32_1 = arith.constant 0 : i32
    return %c0_i32, %c0_i32_0 : i32, i32
  }
  func.func @transform_3(%arg0: i32, %arg1: i32) -> (i32, i32) {
    %c0_i32 = arith.constant 0 : i32
    %c0_i32_0 = arith.constant 0 : i32
    %c0_i32_1 = arith.constant 0 : i32
    return %c0_i32, %c0_i32_0 : i32, i32
  }
  func.func @transform_4(%arg0: i32, %arg1: i32) -> (i32, i32) {
    %c0_i32 = arith.constant 0 : i32
    %c0_i32_0 = arith.constant 0 : i32
    %c0_i32_1 = arith.constant 0 : i32
    return %c0_i32, %c0_i32_0 : i32, i32
  }
  func.func @transform_5(%arg0: i32, %arg1: i32) -> (i32, i32, i32) {
    %c0_i32 = arith.constant 0 : i32
    %c0_i32_0 = arith.constant 0 : i32
    return %arg0, %arg1, %c0_i32 : i32, i32, i32
  }
}

</mosaic_0001>

<llo_original>
// kernel: tpu_custom_call.1
$region0: #{tpu_custom_call.1}
  #allocation0 [shape = 'u32[]', space=smem, size = 0x4, offset = 0x4, fixed_abs, tag = 'smem constant byte address 0x4 - core index']
  #allocation1 [shape = 'u32[144,128]{1,0:T(1,128)}', space=vmem, size = 0x12000, scoped, tag = 'internal scratch']
  #allocation2 [shape = 'bf16[128,128]{1,0:T(16,128)(2,1)}', space=vmem, size = 0x8000, scoped, tag = 'scratch operand']
  #allocation3 [shape = 'bf16[128,128]{1,0:T(16,128)(2,1)}', space=vmem, size = 0x8000, scoped, tag = 'scratch operand']
  #allocation4 [shape = 'f32[4,32,1]{2,1,0:T(8,128)}', space=vmem, size = 0x10000, scoped, tag = 'scratch operand']
  #allocation5 [shape = 'f32[4,32,1]{2,1,0:T(8,128)}', space=vmem, size = 0x10000, scoped, tag = 'scratch operand']
  #allocation6 [shape = 'f32[4,32,32]{2,1,0:T(8,128)}', space=vmem, size = 0x10000, scoped, tag = 'scratch operand']
  %s0 = inlined_call_operand.hbm [shape: bf16[2,128,128], index: 0, kind: input, shape index: {}]
  %s1 = inlined_call_operand.hbm [shape: bf16[128,128], index: 1, kind: input, shape index: {}]
  %s2 = inlined_call_operand.hbm [shape: bf16[128,256], index: 2, kind: input, shape index: {}]
  %s3 = inlined_call_operand.hbm [shape: bf16[128,128], index: 3, kind: input, shape index: {}]
  %s4 = inlined_call_operand.hbm [shape: f32[1,128], index: 4, kind: input, shape index: {}]
  %s5 = inlined_call_operand.hbm [shape: f32[2,128,128], index: 5, kind: output, shape index: {}]
  %s6 = sld [smem:[#allocation0]]
  $region84: #{tpu_custom_call.1} parent=0
    _
  %s8 = ssub.s32 1, %s6
  %s9 = scalar_select 0, %s8, %s6
  $region1: #{tpu_custom_call.1} parent=0
    #allocation7 [shape = 'u8[65536]{0}', space=vmem, size = 0x10000, scoped, tag = 'input window, operand 0']
    #allocation8 [shape = 's32[2]{0}', space=sflag, size = 0x8, scoped, tag = 'scoped memory for tpu_custom_call.1']
    #allocation9 [shape = 's32[2]{0}', space=sflag, size = 0x8, scoped, tag = 'scoped memory for tpu_custom_call.1']
    #allocation10 [shape = 'u8[32768]{0}', space=vmem, size = 0x8000, scoped, tag = 'input window, operand 1, single buffered']
    #allocation11 [shape = 's32[1]{0}', space=sflag, size = 0x4, scoped, tag = 'scoped memory for tpu_custom_call.1']
    #allocation12 [shape = 'u8[65536]{0}', space=vmem, size = 0x10000, scoped, tag = 'input window, operand 2, single buffered']
    #allocation13 [shape = 'u8[32768]{0}', space=vmem, size = 0x8000, scoped, tag = 'input window, operand 3, single buffered']
    #allocation14 [shape = 's32[1]{0}', space=sflag, size = 0x4, scoped, tag = 'scoped memory for tpu_custom_call.1']
    #allocation15 [shape = 'u8[512]{0}', space=vmem, size = 0x400, scoped, tag = 'input window, operand 4, single buffered']
    #allocation16 [shape = 'u8[32768]{0}', space=vmem, size = 0x8000, scoped, tag = 'output window, operand 0']
    %10 = vsyncpa [#allocation8], 0
    %s11 = scalar_lea.sflag [#allocation8], 1
    %12 = vsyncpa %s11, 0
    %13 = vsyncpa [#allocation11], 0
    %14 = vsyncpa [#allocation14], 0
    %15 = vsyncpa [#allocation9], 0
    %s16 = scalar_lea.sflag [#allocation9], 1
    %17 = vsyncpa %s16, 0
    loop: start=0, step=1, limit=10
    $region2: #{tpu_custom_call.1} parent=1 // loop_pre_header
      _
    $region3: #{tpu_custom_call.1} parent=1 // loop_header
      %s19 = sphi 0, %s23
      %p20 = scmp.ge.s32.totalorder %s19, 10
      %s26 = sphi 0, %s38
      %s27 = sphi 0, %s34
      %s28 = sphi 0, %s26
      %s29 = sphi 0, %s27
      %s30 = sphi 0, %s28
      %s31 = sphi 0, %s29
      %s41 = sphi 0, %s43
      %s44 = sphi 0, %s41
      %s45 = sphi 0, %s44
      %s61 = sphi 0, %s45
      %s65 = sphi 0, %s65
      %s67 = sphi 0, %s65
      %s68 = sphi 0, %s67
      %s82 = sphi 0, %s68
      %s86 = sphi 0, %s86
      %s88 = sphi 0, %s86
      %s89 = sphi 0, %s88
      %s103 = sphi 0, %s89
      %s107 = sphi 0, %s107
      %s109 = sphi 0, %s107
      %s110 = sphi 0, %s109
      %s124 = sphi 0, %s110
      %s128 = sphi 0, %s128
      %s130 = sphi 0, %s128
      %s131 = sphi 0, %s130
      %s145 = sphi 0, %s131
      %s153 = sphi 0, %s155
      %s156 = sphi 0, %s153
      %s157 = sphi 0, %s156
      %s173 = sphi 0, %s157
    $region4: #{tpu_custom_call.1} parent=1 // loop_header_branch
      %22 = sbr.rel (%p20) target = $region8
    $region5: #{tpu_custom_call.1} parent=1 // loop_body
      %s24 = ssub.s32 %s19, 1
      %s25 = ssub.s32 %s19, 2
      %s32 = sadd.s32 1, %s27
      %p33 = scmp.ge.s32.totalorder %s32, 4
      %s34 = scalar_select %p33, 0, %s32
      %s35 = sadd.s32 1, %s26
      %s36 = scalar_select %p33, %s35, %s26
      %p37 = scmp.ge.s32.totalorder %s36, 2
      %s38 = scalar_select %p37, 0, %s36
      %s39 = ssub.s32 %s26, %s38
      %p40 = scmp.eq.s32.totalorder %s39, 0
      %s42 = sadd.s32 %s41, 1
      %s43 = scalar_select %p40, %s41, %s42
      %p46 = pneg %p40
      %p47 = scmp.eq.s32.totalorder %s19, 7
      %p48 = por %p46, %p47
      %p49 = scmp.ne.s32.totalorder %s41, %s44
      %p50 = scmp.eq.s32.totalorder %s19, 0
      %p51 = por %p49, %p50
      %p52 = scmp.ne.s32.totalorder %s41, %s44
      %p53 = scmp.eq.s32.totalorder %s24, 7
      %p54 = por %p52, %p53
      %p55 = scmp.ne.s32.totalorder %s44, %s45
      %p56 = scmp.eq.s32.totalorder %s24, 0
      %p57 = por %p55, %p56
      %p58 = scmp.ne.s32.totalorder %s44, %s45
      %p59 = scmp.eq.s32.totalorder %s25, 7
      %p60 = por %p58, %p59
      %p62 = scmp.ne.s32.totalorder %s45, %s61
      %p63 = scmp.eq.s32.totalorder %s25, 0
      %p64 = por %p62, %p63
      %s66 = sadd.s32 %s65, 1
      %p69 = scmp.eq.s32.totalorder %s19, 7
      %p70 = scmp.ne.s32.totalorder %s65, %s67
      %p71 = scmp.eq.s32.totalorder %s19, 0
      %p72 = por %p70, %p71
      %p73 = scmp.ne.s32.totalorder %s65, %s67
      %p74 = scmp.eq.s32.totalorder %s24, 7
      %p75 = por %p73, %p74
      %p76 = scmp.ne.s32.totalorder %s67, %s68
      %p77 = scmp.eq.s32.totalorder %s24, 0
      %p78 = por %p76, %p77
      %p79 = scmp.ne.s32.totalorder %s67, %s68
      %p80 = scmp.eq.s32.totalorder %s25, 7
      %p81 = por %p79, %p80
      %p83 = scmp.ne.s32.totalorder %s68, %s82
      %p84 = scmp.eq.s32.totalorder %s25, 0
      %p85 = por %p83, %p84
      %s87 = sadd.s32 %s86, 1
      %p90 = scmp.eq.s32.totalorder %s19, 7
      %p91 = scmp.ne.s32.totalorder %s86, %s88
      %p92 = scmp.eq.s32.totalorder %s19, 0
      %p93 = por %p91, %p92
      %p94 = scmp.ne.s32.totalorder %s86, %s88
      %p95 = scmp.eq.s32.totalorder %s24, 7
      %p96 = por %p94, %p95
      %p97 = scmp.ne.s32.totalorder %s88, %s89
      %p98 = scmp.eq.s32.totalorder %s24, 0
      %p99 = por %p97, %p98
      %p100 = scmp.ne.s32.totalorder %s88, %s89
      %p101 = scmp.eq.s32.totalorder %s25, 7
      %p102 = por %p100, %p101
      %p104 = scmp.ne.s32.totalorder %s89, %s103
      %p105 = scmp.eq.s32.totalorder %s25, 0
      %p106 = por %p104, %p105
      %s108 = sadd.s32 %s107, 1
      %p111 = scmp.eq.s32.totalorder %s19, 7
      %p112 = scmp.ne.s32.totalorder %s107, %s109
      %p113 = scmp.eq.s32.totalorder %s19, 0
      %p114 = por %p112, %p113
      %p115 = scmp.ne.s32.totalorder %s107, %s109
      %p116 = scmp.eq.s32.totalorder %s24, 7
      %p117 = por %p115, %p116
      %p118 = scmp.ne.s32.totalorder %s109, %s110
      %p119 = scmp.eq.s32.totalorder %s24, 0
      %p120 = por %p118, %p119
      %p121 = scmp.ne.s32.totalorder %s109, %s110
      %p122 = scmp.eq.s32.totalorder %s25, 7
      %p123 = por %p121, %p122
      %p125 = scmp.ne.s32.totalorder %s110, %s124
      %p126 = scmp.eq.s32.totalorder %s25, 0
      %p127 = por %p125, %p126
      %s129 = sadd.s32 %s128, 1
      %p132 = scmp.eq.s32.totalorder %s19, 7
      %p133 = scmp.ne.s32.totalorder %s128, %s130
      %p134 = scmp.eq.s32.totalorder %s19, 0
      %p135 = por %p133, %p134
      %p136 = scmp.ne.s32.totalorder %s128, %s130
      %p137 = scmp.eq.s32.totalorder %s24, 7
      %p138 = por %p136, %p137
      %p139 = scmp.ne.s32.totalorder %s130, %s131
      %p140 = scmp.eq.s32.totalorder %s24, 0
      %p141 = por %p139, %p140
      %p142 = scmp.ne.s32.totalorder %s130, %s131
      %p143 = scmp.eq.s32.totalorder %s25, 7
      %p144 = por %p142, %p143
      %p146 = scmp.ne.s32.totalorder %s131, %s145
      %p147 = scmp.eq.s32.totalorder %s25, 0
      %p148 = por %p146, %p147
      %s149 = ssub.s32 %s26, %s38
      %s150 = ssub.s32 %s27, %s34
      %s151 = sor.u32 %s149, %s150
      %p152 = scmp.eq.s32.totalorder %s151, 0
      %s154 = sadd.s32 %s153, 1
      %s155 = scalar_select %p152, %s153, %s154
      %p158 = pneg %p152
      %p159 = scmp.eq.s32.totalorder %s19, 7
      %p160 = por %p158, %p159
      %p161 = scmp.ne.s32.totalorder %s153, %s156
      %p162 = scmp.eq.s32.totalorder %s19, 0
      %p163 = por %p161, %p162
      %p164 = scmp.ne.s32.totalorder %s153, %s156
      %p165 = scmp.eq.s32.totalorder %s24, 7
      %p166 = por %p164, %p165
      %p167 = scmp.ne.s32.totalorder %s156, %s157
      %p168 = scmp.eq.s32.totalorder %s24, 0
      %p169 = por %p167, %p168
      %p170 = scmp.ne.s32.totalorder %s156, %s157
      %p171 = scmp.eq.s32.totalorder %s25, 7
      %p172 = por %p170, %p171
      %p174 = scmp.ne.s32.totalorder %s157, %s173
      %p175 = scmp.eq.s32.totalorder %s25, 0
      %p176 = por %p174, %p175
      %p177 = scmp.le.s32.totalorder 1, %s19
      %p178 = scmp.lt.s32.totalorder %s19, 9
      %p179 = pnand %p177, %p178
      %p180 = pneg %p179
      // Predicated region
      $region9: #{tpu_custom_call.1} parent=5 // pred_check
        _
      $region10: #{tpu_custom_call.1} parent=5 // pred_check_branch
        %182 = sbr.rel (%p179) target = $region12
      $region11: #{tpu_custom_call.1} parent=5 // pred_region
        %s183 = ssub.s32 %s19, 1
        // Predicated region
        $region13: #{tpu_custom_call.1} parent=11 // pred_check
          %p184 = pneg %p78
        $region14: #{tpu_custom_call.1} parent=11 // pred_check_branch
          %186 = sbr.rel (%p184) target = $region16
        $region15: #{tpu_custom_call.1} parent=11 // pred_region
          %s188 = ssub.s32 1024, 1024
          %189 = vsyncadd [#allocation11], %s188
          %s190 = sshll.u32 [#allocation10], 4
          %s191 = int_to_ptr.vmem [resolvable:$true] %s190
          %196 = dma.hbm_to_vmem [thread:$0]  %s1, 1024, %s191, [#allocation11], 64, 64, 4
        $region16: #{tpu_custom_call.1} parent=11 // pred_fallthru
          _
        // Predicated region
        $region17: #{tpu_custom_call.1} parent=11 // pred_check
          %p197 = pneg %p99
        $region18: #{tpu_custom_call.1} parent=11 // pred_check_branch
          %199 = sbr.rel (%p197) target = $region20
        $region19: #{tpu_custom_call.1} parent=11 // pred_region
          %s201 = ssub.s32 2048, 2048
          %202 = vsyncadd [#allocation11], %s201
          %s203 = sshll.u32 [#allocation12], 4
          %s204 = int_to_ptr.vmem [resolvable:$true] %s203
          %209 = dma.hbm_to_vmem [thread:$0]  %s2, 2048, %s204, [#allocation11], 128, 128, 8
        $region20: #{tpu_custom_call.1} parent=11 // pred_fallthru
          _
        // Predicated region
        $region21: #{tpu_custom_call.1} parent=11 // pred_check
          %p210 = pneg %p120
        $region22: #{tpu_custom_call.1} parent=11 // pred_check_branch
          %212 = sbr.rel (%p210) target = $region24
        $region23: #{tpu_custom_call.1} parent=11 // pred_region
          %s214 = ssub.s32 1024, 1024
          %215 = vsyncadd [#allocation14], %s214
          %s216 = sshll.u32 [#allocation13], 4
          %s217 = int_to_ptr.vmem [resolvable:$true] %s216
          %222 = dma.hbm_to_vmem [thread:$0]  %s3, 1024, %s217, [#allocation14], 64, 64, 4
        $region24: #{tpu_custom_call.1} parent=11 // pred_fallthru
          _
        // Predicated region
        $region25: #{tpu_custom_call.1} parent=11 // pred_check
          %p223 = pneg %p141
        $region26: #{tpu_custom_call.1} parent=11 // pred_check_branch
          %225 = sbr.rel (%p223) target = $region28
        $region27: #{tpu_custom_call.1} parent=11 // pred_region
          %s227 = ssub.s32 16, 16
          %228 = vsyncadd [#allocation14], %s227
          %s230 = sshll.u32 [#allocation15], 4
          %s231 = int_to_ptr.vmem [resolvable:$true] %s230
          %233 = dma.hbm_to_vmem [thread:$0]  %s4, 16, %s231, [#allocation14]
        $region28: #{tpu_custom_call.1} parent=11 // pred_fallthru
          _
      $region12: #{tpu_custom_call.1} parent=5 // pred_fallthru
        _
      %p234 = scmp.lt.s32.totalorder %s19, 8
      // Predicated region
      $region29: #{tpu_custom_call.1} parent=5 // pred_check
        %p235 = pneg %p234
      $region30: #{tpu_custom_call.1} parent=5 // pred_check_branch
        %237 = sbr.rel (%p235) target = $region32
      $region31: #{tpu_custom_call.1} parent=5 // pred_region
        // Predicated region
        $region33: #{tpu_custom_call.1} parent=31 // pred_check
          %p238 = pneg %p51
        $region34: #{tpu_custom_call.1} parent=31 // pred_check_branch
          %240 = sbr.rel (%p238) target = $region36
        $region35: #{tpu_custom_call.1} parent=31 // pred_region
          %s241 = sand.u32 %s41, 1
          %s242 = scalar_lea.sflag [#allocation8], %s241
          %s243 = sand.u32 %s41, 1
          %s244 = smul.addr %s243, 64
          %s245 = scalar_lea.vmem [#allocation7], %s244
          %s247 = ssub.s32 1024, 1024
          %248 = vsyncadd %s242, %s247
          %s249 = smul.addr %s26, 16
          %s250 = smul.addr %s249, 64
          %s251 = scalar_lea.hbm %s0, %s250
          %s252 = sshll.u32 %s245, 4
          %s253 = int_to_ptr.vmem [resolvable:$true] %s252
          %258 = dma.hbm_to_vmem [thread:$0]  %s251, 1024, %s253, %s242, 64, 64, 4
        $region36: #{tpu_custom_call.1} parent=31 // pred_fallthru
          _
      $region32: #{tpu_custom_call.1} parent=5 // pred_fallthru
        _
      %p259 = scmp.le.s32.totalorder 1, %s19
      %p260 = scmp.lt.s32.totalorder %s19, 9
      %p261 = pnand %p259, %p260
      %p262 = pneg %p261
      // Predicated region
      $region37: #{tpu_custom_call.1} parent=5 // pred_check
        _
      $region38: #{tpu_custom_call.1} parent=5 // pred_check_branch
        %264 = sbr.rel (%p261) target = $region40
      $region39: #{tpu_custom_call.1} parent=5 // pred_region
        %s265 = ssub.s32 %s19, 1
        %s266 = sand.u32 %s44, 1
        %s267 = scalar_lea.sflag [#allocation8], %s266
        %s268 = sand.u32 %s44, 1
        %s269 = smul.addr %s268, 64
        %s270 = scalar_lea.vmem [#allocation7], %s269
        // Predicated region
        $region41: #{tpu_custom_call.1} parent=39 // pred_check
          %p271 = pneg %p57
        $region42: #{tpu_custom_call.1} parent=39 // pred_check_branch
          %273 = sbr.rel (%p271) target = $region44
        $region43: #{tpu_custom_call.1} parent=39 // pred_region
          %274 = dma.done %s267, 1024
        $region44: #{tpu_custom_call.1} parent=39 // pred_fallthru
          _
        // Predicated region
        $region45: #{tpu_custom_call.1} parent=39 // pred_check
          %p275 = pneg %p78
        $region46: #{tpu_custom_call.1} parent=39 // pred_check_branch
          %277 = sbr.rel (%p275) target = $region48
        $region47: #{tpu_custom_call.1} parent=39 // pred_region
          %278 = dma.done [#allocation11], 1024
        $region48: #{tpu_custom_call.1} parent=39 // pred_fallthru
          _
        // Predicated region
        $region49: #{tpu_custom_call.1} parent=39 // pred_check
          %p279 = pneg %p99
        $region50: #{tpu_custom_call.1} parent=39 // pred_check_branch
          %281 = sbr.rel (%p279) target = $region52
        $region51: #{tpu_custom_call.1} parent=39 // pred_region
          %282 = dma.done [#allocation11], 2048
        $region52: #{tpu_custom_call.1} parent=39 // pred_fallthru
          _
        // Predicated region
        $region53: #{tpu_custom_call.1} parent=39 // pred_check
          %p283 = pneg %p120
        $region54: #{tpu_custom_call.1} parent=39 // pred_check_branch
          %285 = sbr.rel (%p283) target = $region56
        $region55: #{tpu_custom_call.1} parent=39 // pred_region
          %286 = dma.done [#allocation14], 1024
        $region56: #{tpu_custom_call.1} parent=39 // pred_fallthru
          _
        // Predicated region
        $region57: #{tpu_custom_call.1} parent=39 // pred_check
          %p287 = pneg %p141
        $region58: #{tpu_custom_call.1} parent=39 // pred_check_branch
          %289 = sbr.rel (%p287) target = $region60
        $region59: #{tpu_custom_call.1} parent=39 // pred_region
          %290 = dma.done [#allocation14], 16
        $region60: #{tpu_custom_call.1} parent=39 // pred_fallthru
          _
        %s291 = sand.u32 %s44, 1
        %s292 = scalar_lea.sflag [#allocation8], %s291
        %s293 = sand.u32 %s44, 1
        %s294 = smul.addr %s293, 64
        %s295 = scalar_lea.vmem [#allocation7], %s294
        %p296 = pneg %p57
        %p297 = pneg %p54
        %p298 = pneg %p78
        %p299 = pneg %p75
        %p300 = pneg %p99
        %p301 = pneg %p96
        %p302 = pneg %p120
        %p303 = pneg %p117
        %p304 = pneg %p141
        %p305 = pneg %p138
        %p306 = pneg %p169
        %p307 = pneg %p166
        %s308 = sand.u32 %s156, 1
        %s309 = scalar_lea.sflag [#allocation9], %s308
        %s310 = sand.u32 %s156, 1
        %s311 = smul.addr %s310, 32
        %s312 = scalar_lea.vmem [#allocation16], %s311
        %s313 = smul.u32 4, %s29
        %s315 = smul.u32 %s29, 32
        %p316 = scmp.eq.s32.totalorder %s29, 0
        // Predicated region
        $region61: #{tpu_custom_call.1} parent=39 // pred_check
          %p317 = pneg %p316
        $region62: #{tpu_custom_call.1} parent=39 // pred_check_branch
          %319 = sbr.rel (%p317) target = $region64
        $region63: #{tpu_custom_call.1} parent=39 // pred_region
          %v320 = vld [vmem:[%s270] sm:$0xf]
          %v321 = vld [vmem:[%s270 + $0x4] sm:$0xf]
          %v322 = vld [vmem:[%s270 + $0x8] sm:$0xf]
          %v323 = vld [vmem:[%s270 + $0xc] sm:$0xf]
          %v324 = vld [vmem:[%s270 + $0x10] sm:$0xf]
          %v325 = vld [vmem:[%s270 + $0x14] sm:$0xf]
          %v326 = vld [vmem:[%s270 + $0x18] sm:$0xf]
          %v327 = vld [vmem:[%s270 + $0x1c] sm:$0xf]
          %v328 = vld [vmem:[%s270 + $0x20] sm:$0xf]
          %v329 = vld [vmem:[%s270 + $0x24] sm:$0xf]
          %v330 = vld [vmem:[%s270 + $0x28] sm:$0xf]
          %v331 = vld [vmem:[%s270 + $0x2c] sm:$0xf]
          %v332 = vld [vmem:[%s270 + $0x30] sm:$0xf]
          %v333 = vld [vmem:[%s270 + $0x34] sm:$0xf]
          %v334 = vld [vmem:[%s270 + $0x38] sm:$0xf]
          %v335 = vld [vmem:[%s270 + $0x3c] sm:$0xf]
          %v336 = vld [vmem:[#allocation12] sm:$0xff]
          %v337 = vld [vmem:[#allocation12 + $0x8] sm:$0xff]
          %v338 = vld [vmem:[#allocation12 + $0x10] sm:$0xff]
          %v339 = vld [vmem:[#allocation12 + $0x18] sm:$0xff]
          %v340 = vld [vmem:[#allocation12 + $0x20] sm:$0xff]
          %v341 = vld [vmem:[#allocation12 + $0x28] sm:$0xff]
          %v342 = vld [vmem:[#allocation12 + $0x30] sm:$0xff]
          %v343 = vld [vmem:[#allocation12 + $0x38] sm:$0xff]
          %v344 = vld [vmem:[#allocation12 + $0x40] sm:$0xff]
          %v345 = vld [vmem:[#allocation12 + $0x48] sm:$0xff]
          %v346 = vld [vmem:[#allocation12 + $0x50] sm:$0xff]
          %v347 = vld [vmem:[#allocation12 + $0x58] sm:$0xff]
          %v348 = vld [vmem:[#allocation12 + $0x60] sm:$0xff]
          %v349 = vld [vmem:[#allocation12 + $0x68] sm:$0xff]
          %v350 = vld [vmem:[#allocation12 + $0x70] sm:$0xff]
          %v351 = vld [vmem:[#allocation12 + $0x78] sm:$0xff]
          %v368 = vunpack.c.l.b16 %v320
          %v369 = vunpack.c.l.b16 %v321
          %v370 = vunpack.c.l.b16 %v322
          %v371 = vunpack.c.l.b16 %v323
          %v372 = vunpack.c.l.b16 %v324
          %v373 = vunpack.c.l.b16 %v325
          %v374 = vunpack.c.l.b16 %v326
          %v375 = vunpack.c.l.b16 %v327
          %v376 = vunpack.c.l.b16 %v328
          %v377 = vunpack.c.l.b16 %v329
          %v378 = vunpack.c.l.b16 %v330
          %v379 = vunpack.c.l.b16 %v331
          %v380 = vunpack.c.l.b16 %v332
          %v381 = vunpack.c.l.b16 %v333
          %v382 = vunpack.c.l.b16 %v334
          %v383 = vunpack.c.l.b16 %v335
          %v384 = vpack.c.b16 %v369, %v368
          %v385 = vpack.c.b16 %v371, %v370
          %v386 = vpack.c.b16 %v373, %v372
          %v387 = vpack.c.b16 %v375, %v374
          %v388 = vpack.c.b16 %v377, %v376
          %v389 = vpack.c.b16 %v379, %v378
          %v390 = vpack.c.b16 %v381, %v380
          %v391 = vpack.c.b16 %v383, %v382
          %v416 = vunpack.c.l.b16 %v336
          %v417 = vunpack.c.h.b16 %v336
          %v418 = vunpack.c.l.b16 %v337
          %v419 = vunpack.c.h.b16 %v337
          %v420 = vunpack.c.l.b16 %v338
          %v421 = vunpack.c.h.b16 %v338
          %v422 = vunpack.c.l.b16 %v339
          %v423 = vunpack.c.h.b16 %v339
          %v424 = vunpack.c.l.b16 %v340
          %v425 = vunpack.c.h.b16 %v340
          %v426 = vunpack.c.l.b16 %v341
          %v427 = vunpack.c.h.b16 %v341
          %v428 = vunpack.c.l.b16 %v342
          %v429 = vunpack.c.h.b16 %v342
          %v430 = vunpack.c.l.b16 %v343
          %v431 = vunpack.c.h.b16 %v343
          %v432 = vunpack.c.l.b16 %v344
          %v433 = vunpack.c.h.b16 %v344
          %v434 = vunpack.c.l.b16 %v345
          %v435 = vunpack.c.h.b16 %v345
          %v436 = vunpack.c.l.b16 %v346
          %v437 = vunpack.c.h.b16 %v346
          %v438 = vunpack.c.l.b16 %v347
          %v439 = vunpack.c.h.b16 %v347
          %v440 = vunpack.c.l.b16 %v348
          %v441 = vunpack.c.h.b16 %v348
          %v442 = vunpack.c.l.b16 %v349
          %v443 = vunpack.c.h.b16 %v349
          %v444 = vunpack.c.l.b16 %v350
          %v445 = vunpack.c.h.b16 %v350
          %v446 = vunpack.c.l.b16 %v351
          %v447 = vunpack.c.h.b16 %v351
          %v448 = vpack.c.b16 %v418, %v416
          %v449 = vpack.c.b16 %v419, %v417
          %v450 = vpack.c.b16 %v422, %v420
          %v451 = vpack.c.b16 %v423, %v421
          %v452 = vpack.c.b16 %v426, %v424
          %v453 = vpack.c.b16 %v427, %v425
          %v454 = vpack.c.b16 %v430, %v428
          %v455 = vpack.c.b16 %v431, %v429
          %v456 = vpack.c.b16 %v434, %v432
          %v457 = vpack.c.b16 %v435, %v433
          %v458 = vpack.c.b16 %v438, %v436
          %v459 = vpack.c.b16 %v439, %v437
          %v460 = vpack.c.b16 %v442, %v440
          %v461 = vpack.c.b16 %v443, %v441
          %v462 = vpack.c.b16 %v446, %v444
          %v463 = vpack.c.b16 %v447, %v445
          %480 = vmatprep.subr.bf16.mxu0 %v449
          %481 = vmatpush1.bf16.msra.mxu0 %v448
          %482 = vmatprep.subr.bf16.mxu0 %v451
          %483 = vmatpush1.bf16.msra.mxu0 %v450
          %484 = vmatprep.subr.bf16.mxu0 %v453
          %485 = vmatpush1.bf16.msra.mxu0 %v452
          %486 = vmatprep.subr.bf16.mxu0 %v455
          %487 = vmatpush1.bf16.msra.mxu0 %v454
          %488 = vmatprep.subr.bf16.mxu0 %v457
          %489 = vmatpush1.bf16.msra.mxu0 %v456
          %490 = vmatprep.subr.bf16.mxu0 %v459
          %491 = vmatpush1.bf16.msra.mxu0 %v458
          %492 = vmatprep.subr.bf16.mxu0 %v461
          %493 = vmatpush1.bf16.msra.mxu0 %v460
          %494 = vmatprep.subr.bf16.mxu0 %v463
          %495 = vmatpush1.bf16.msra.mxu0 %v462
          %496 = vmatprep.subr.bf16.mxu0 0
          %497 = vmatpush1.bf16.msra.mxu0 0
          %498 = vmatprep.subr.bf16.mxu0 0
          %499 = vmatpush1.bf16.msra.mxu0 0
          %500 = vmatprep.subr.bf16.mxu0 0
          %501 = vmatpush1.bf16.msra.mxu0 0
          %502 = vmatprep.subr.bf16.mxu0 0
          %503 = vmatpush1.bf16.msra.mxu0 0
          %504 = vmatprep.subr.bf16.mxu0 0
          %505 = vmatpush1.bf16.msra.mxu0 0
          %506 = vmatprep.subr.bf16.mxu0 0
          %507 = vmatpush1.bf16.msra.mxu0 0
          %508 = vmatprep.subr.bf16.mxu0 0
          %509 = vmatpush1.bf16.msra.mxu0 0
          %510 = vmatprep.subr.bf16.mxu0 0
          %511 = vmatpush1.bf16.msra.mxu0 0
          %512 = vmatprep.mubr.bf16.mxu0 0
          %513 = vmatmul.mubr.bf16.gmra.mrb[0].mxu0 %v384
          %v514 = vpop.f32.mrb[0].mxu0
          %v515 = vadd.f32 0.0, %v514
          %v516 = vpop.f32.mrb[0].mxu0
          %v517 = vadd.f32 0.0, %v516
          %v518 = vpop.f32.mrb[0].mxu0
          %v519 = vadd.f32 0.0, %v518
          %v520 = vpop.f32.mrb[0].mxu0
          %v521 = vadd.f32 0.0, %v520
          %522 = vmatprep.mubr.bf16.mxu0 0
          %523 = vmatmul.mubr.bf16.gmra.mrb[0].mxu0 %v385
          %v524 = vpop.f32.mrb[0].mxu0
          %v525 = vadd.f32 0.0, %v524
          %v526 = vpop.f32.mrb[0].mxu0
          %v527 = vadd.f32 0.0, %v526
          %v528 = vpop.f32.mrb[0].mxu0
          %v529 = vadd.f32 0.0, %v528
          %v530 = vpop.f32.mrb[0].mxu0
          %v531 = vadd.f32 0.0, %v530
          %532 = vmatprep.mubr.bf16.mxu0 0
          %533 = vmatmul.mubr.bf16.gmra.mrb[0].mxu0 %v386
          %v534 = vpop.f32.mrb[0].mxu0
          %v535 = vadd.f32 0.0, %v534
          %v536 = vpop.f32.mrb[0].mxu0
          %v537 = vadd.f32 0.0, %v536
          %v538 = vpop.f32.mrb[0].mxu0
          %v539 = vadd.f32 0.0, %v538
          %v540 = vpop.f32.mrb[0].mxu0
          %v541 = vadd.f32 0.0, %v540
          %542 = vmatprep.mubr.bf16.mxu0 0
          %543 = vmatmul.mubr.bf16.gmra.mrb[0].mxu0 %v387
          %v544 = vpop.f32.mrb[0].mxu0
          %v545 = vadd.f32 0.0, %v544
          %v546 = vpop.f32.mrb[0].mxu0
          %v547 = vadd.f32 0.0, %v546
          %v548 = vpop.f32.mrb[0].mxu0
          %v549 = vadd.f32 0.0, %v548
          %v550 = vpop.f32.mrb[0].mxu0
          %v551 = vadd.f32 0.0, %v550
          %552 = vmatprep.mubr.bf16.mxu0 0
          %553 = vmatmul.mubr.bf16.gmra.mrb[0].mxu0 %v388
          %v554 = vpop.f32.mrb[0].mxu0
          %v555 = vadd.f32 0.0, %v554
          %v556 = vpop.f32.mrb[0].mxu0
          %v557 = vadd.f32 0.0, %v556
          %v558 = vpop.f32.mrb[0].mxu0
          %v559 = vadd.f32 0.0, %v558
          %v560 = vpop.f32.mrb[0].mxu0
          %v561 = vadd.f32 0.0, %v560
          %562 = vmatprep.mubr.bf16.mxu0 0
          %563 = vmatmul.mubr.bf16.gmra.mrb[0].mxu0 %v389
          %v564 = vpop.f32.mrb[0].mxu0
          %v565 = vadd.f32 0.0, %v564
          %v566 = vpop.f32.mrb[0].mxu0
          %v567 = vadd.f32 0.0, %v566
          %v568 = vpop.f32.mrb[0].mxu0
          %v569 = vadd.f32 0.0, %v568
          %v570 = vpop.f32.mrb[0].mxu0
          %v571 = vadd.f32 0.0, %v570
          %572 = vmatprep.mubr.bf16.mxu0 0
          %573 = vmatmul.mubr.bf16.gmra.mrb[0].mxu0 %v390
          %v574 = vpop.f32.mrb[0].mxu0
          %v575 = vadd.f32 0.0, %v574
          %v576 = vpop.f32.mrb[0].mxu0
          %v577 = vadd.f32 0.0, %v576
          %v578 = vpop.f32.mrb[0].mxu0
          %v579 = vadd.f32 0.0, %v578
          %v580 = vpop.f32.mrb[0].mxu0
          %v581 = vadd.f32 0.0, %v580
          %582 = vmatprep.mubr.bf16.mxu0 0
          %583 = vmatmul.mubr.bf16.gmra.mrb[0].mxu0 %v391
          %v584 = vpop.f32.mrb[0].mxu0
          %v585 = vadd.f32 0.0, %v584
          %v586 = vpop.f32.mrb[0].mxu0
          %v587 = vadd.f32 0.0, %v586
          %v588 = vpop.f32.mrb[0].mxu0
          %v589 = vadd.f32 0.0, %v588
          %v590 = vpop.f32.mrb[0].mxu0
          %v591 = vadd.f32 0.0, %v590
          %592 = vdwg.mxu0
          %v593 = vpack.c.bf16 %v519, %v515
          %v594 = vpack.c.bf16 %v529, %v525
          %v595 = vpack.c.bf16 %v539, %v535
          %v596 = vpack.c.bf16 %v549, %v545
          %v597 = vpack.c.bf16 %v559, %v555
          %v598 = vpack.c.bf16 %v569, %v565
          %v599 = vpack.c.bf16 %v579, %v575
          %v600 = vpack.c.bf16 %v589, %v585
          %601 = vst [vmem:[#allocation2] sm:$0xff] %v593
          %602 = vst [vmem:[#allocation2 + $0x8] sm:$0xff] %v594
          %603 = vst [vmem:[#allocation2 + $0x10] sm:$0xff] %v595
          %604 = vst [vmem:[#allocation2 + $0x18] sm:$0xff] %v596
          %605 = vst [vmem:[#allocation2 + $0x20] sm:$0xff] %v597
          %606 = vst [vmem:[#allocation2 + $0x28] sm:$0xff] %v598
          %607 = vst [vmem:[#allocation2 + $0x30] sm:$0xff] %v599
          %608 = vst [vmem:[#allocation2 + $0x38] sm:$0xff] %v600
          %v609 = vpack.c.bf16 %v521, %v517
          %v610 = vpack.c.bf16 %v531, %v527
          %v611 = vpack.c.bf16 %v541, %v537
          %v612 = vpack.c.bf16 %v551, %v547
          %v613 = vpack.c.bf16 %v561, %v557
          %v614 = vpack.c.bf16 %v571, %v567
          %v615 = vpack.c.bf16 %v581, %v577
          %v616 = vpack.c.bf16 %v591, %v587
          %617 = vst [vmem:[#allocation3] sm:$0xff] %v609
          %618 = vst [vmem:[#allocation3 + $0x8] sm:$0xff] %v610
          %619 = vst [vmem:[#allocation3 + $0x10] sm:$0xff] %v611
          %620 = vst [vmem:[#allocation3 + $0x18] sm:$0xff] %v612
          %621 = vst [vmem:[#allocation3 + $0x20] sm:$0xff] %v613
          %622 = vst [vmem:[#allocation3 + $0x28] sm:$0xff] %v614
          %623 = vst [vmem:[#allocation3 + $0x30] sm:$0xff] %v615
          %624 = vst [vmem:[#allocation3 + $0x38] sm:$0xff] %v616
        $region64: #{tpu_custom_call.1} parent=39 // pred_fallthru
          _
        %s625 = sshra.s32 %s315, 3
        %s626 = sand.u32 %s315, 7
        %s627 = smul.addr %s625, 4
        %s628 = scalar_lea.vmem %s270, %s627 [#allocation7]
        %v629 = vld [vmem:[%s628] sm:$0xf]
        %v630 = vld [vmem:[%s628 + $0x4] sm:$0xf]
        %v631 = vld [vmem:[%s628 + $0x8] sm:$0xf]
        %v632 = vld [vmem:[%s628 + $0xc] sm:$0xf]
        %v633 = vld [vmem:[#allocation10] sm:$0xf]
        %v634 = vld [vmem:[#allocation10 + $0x4] sm:$0xf]
        %v635 = vld [vmem:[#allocation10 + $0x8] sm:$0xf]
        %v636 = vld [vmem:[#allocation10 + $0xc] sm:$0xf]
        %v637 = vld [vmem:[#allocation10 + $0x10] sm:$0xf]
        %v638 = vld [vmem:[#allocation10 + $0x14] sm:$0xf]
        %v639 = vld [vmem:[#allocation10 + $0x18] sm:$0xf]
        %v640 = vld [vmem:[#allocation10 + $0x1c] sm:$0xf]
        %v641 = vld [vmem:[#allocation10 + $0x20] sm:$0xf]
        %v642 = vld [vmem:[#allocation10 + $0x24] sm:$0xf]
        %v643 = vld [vmem:[#allocation10 + $0x28] sm:$0xf]
        %v644 = vld [vmem:[#allocation10 + $0x2c] sm:$0xf]
        %v645 = vld [vmem:[#allocation10 + $0x30] sm:$0xf]
        %v646 = vld [vmem:[#allocation10 + $0x34] sm:$0xf]
        %v647 = vld [vmem:[#allocation10 + $0x38] sm:$0xf]
        %v648 = vld [vmem:[#allocation10 + $0x3c] sm:$0xf]
        %v653 = vunpack.c.l.b16 %v629
        %v654 = vunpack.c.l.b16 %v630
        %v655 = vunpack.c.l.b16 %v631
        %v656 = vunpack.c.l.b16 %v632
        %v657 = vpack.c.b16 %v654, %v653
        %v658 = vpack.c.b16 %v656, %v655
        %v677 = vunpack.c.l.b16 %v633
        %v678 = vunpack.c.l.b16 %v634
        %v679 = vunpack.c.l.b16 %v635
        %v680 = vunpack.c.l.b16 %v636
        %v681 = vunpack.c.l.b16 %v637
        %v682 = vunpack.c.l.b16 %v638
        %v683 = vunpack.c.l.b16 %v639
        %v684 = vunpack.c.l.b16 %v640
        %v685 = vunpack.c.l.b16 %v641
        %v686 = vunpack.c.l.b16 %v642
        %v687 = vunpack.c.l.b16 %v643
        %v688 = vunpack.c.l.b16 %v644
        %v689 = vunpack.c.l.b16 %v645
        %v690 = vunpack.c.l.b16 %v646
        %v691 = vunpack.c.l.b16 %v647
        %v692 = vunpack.c.l.b16 %v648
        %v693 = vpack.c.b16 %v678, %v677
        %v694 = vpack.c.b16 %v680, %v679
        %v695 = vpack.c.b16 %v682, %v681
        %v696 = vpack.c.b16 %v684, %v683
        %v697 = vpack.c.b16 %v686, %v685
        %v698 = vpack.c.b16 %v688, %v687
        %v699 = vpack.c.b16 %v690, %v689
        %v700 = vpack.c.b16 %v692, %v691
        %709 = vmatprep.subr.bf16.mxu0 0
        %710 = vmatpush1.bf16.msra.mxu0 %v693
        %711 = vmatprep.subr.bf16.mxu0 0
        %712 = vmatpush1.bf16.msra.mxu0 %v694
        %713 = vmatprep.subr.bf16.mxu0 0
        %714 = vmatpush1.bf16.msra.mxu0 %v695
        %715 = vmatprep.subr.bf16.mxu0 0
        %716 = vmatpush1.bf16.msra.mxu0 %v696
        %717 = vmatprep.subr.bf16.mxu0 0
        %718 = vmatpush1.bf16.msra.mxu0 %v697
        %719 = vmatprep.subr.bf16.mxu0 0
        %720 = vmatpush1.bf16.msra.mxu0 %v698
        %721 = vmatprep.subr.bf16.mxu0 0
        %722 = vmatpush1.bf16.msra.mxu0 %v699
        %723 = vmatprep.subr.bf16.mxu0 0
        %724 = vmatpush1.bf16.msra.mxu0 %v700
        %725 = vmatprep.subr.bf16.mxu0 0
        %726 = vmatpush1.bf16.msra.mxu0 0
        %727 = vmatprep.subr.bf16.mxu0 0
        %728 = vmatpush1.bf16.msra.mxu0 0
        %729 = vmatprep.subr.bf16.mxu0 0
        %730 = vmatpush1.bf16.msra.mxu0 0
        %731 = vmatprep.subr.bf16.mxu0 0
        %732 = vmatpush1.bf16.msra.mxu0 0
        %733 = vmatprep.subr.bf16.mxu0 0
        %734 = vmatpush1.bf16.msra.mxu0 0
        %735 = vmatprep.subr.bf16.mxu0 0
        %736 = vmatpush1.bf16.msra.mxu0 0
        %737 = vmatprep.subr.bf16.mxu0 0
        %738 = vmatpush1.bf16.msra.mxu0 0
        %739 = vmatprep.subr.bf16.mxu0 0
        %740 = vmatpush1.bf16.msra.mxu0 0
        %741 = vmatprep.mubr.bf16.mxu0 0
        %742 = vmatmul.mubr.bf16.gmra.mrb[0].mxu0 %v657
        %v743 = vpop.f32.mrb[0].mxu0
        %v744 = vadd.f32 0.0, %v743
        %v745 = vpop.f32.mrb[0].mxu0
        %v746 = vpop.f32.mrb[0].mxu0
        %v747 = vadd.f32 0.0, %v746
        %v748 = vpop.f32.mrb[0].mxu0
        %749 = vmatprep.mubr.bf16.mxu0 0
        %750 = vmatmul.mubr.bf16.gmra.mrb[0].mxu0 %v658
        %v751 = vpop.f32.mrb[0].mxu0
        %v752 = vadd.f32 0.0, %v751
        %v753 = vpop.f32.mrb[0].mxu0
        %v754 = vpop.f32.mrb[0].mxu0
        %v755 = vadd.f32 0.0, %v754
        %v756 = vpop.f32.mrb[0].mxu0
        %757 = vdwg.mxu0
        %v758 = vmul.f32 %v744, 0.088388346
        %v759 = vmul.f32 %v747, 0.088388346
        %v760 = vmul.f32 %v752, 0.088388346
        %v761 = vmul.f32 %v755, 0.088388346
        %v762 = vpack.c.bf16 %v759, %v758
        %v763 = vpack.c.bf16 %v761, %v760
        %vm764 = vcmask 7168
        %765 = vst.msk [vmem:[#allocation4] sm:$0xff] %vm764, -1e+30
        %766 = vst.msk [vmem:[#allocation4 + $0x8] sm:$0xff] %vm764, -1e+30
        %767 = vst.msk [vmem:[#allocation4 + $0x10] sm:$0xff] %vm764, -1e+30
        %768 = vst.msk [vmem:[#allocation4 + $0x18] sm:$0xff] %vm764, -1e+30
        %769 = vst.msk [vmem:[#allocation4 + $0x20] sm:$0xff] %vm764, -1e+30
        %770 = vst.msk [vmem:[#allocation4 + $0x28] sm:$0xff] %vm764, -1e+30
        %771 = vst.msk [vmem:[#allocation4 + $0x30] sm:$0xff] %vm764, -1e+30
        %772 = vst.msk [vmem:[#allocation4 + $0x38] sm:$0xff] %vm764, -1e+30
        %773 = vst.msk [vmem:[#allocation4 + $0x40] sm:$0xff] %vm764, -1e+30
        %774 = vst.msk [vmem:[#allocation4 + $0x48] sm:$0xff] %vm764, -1e+30
        %775 = vst.msk [vmem:[#allocation4 + $0x50] sm:$0xff] %vm764, -1e+30
        %776 = vst.msk [vmem:[#allocation4 + $0x58] sm:$0xff] %vm764, -1e+30
        %777 = vst.msk [vmem:[#allocation4 + $0x60] sm:$0xff] %vm764, -1e+30
        %778 = vst.msk [vmem:[#allocation4 + $0x68] sm:$0xff] %vm764, -1e+30
        %779 = vst.msk [vmem:[#allocation4 + $0x70] sm:$0xff] %vm764, -1e+30
        %780 = vst.msk [vmem:[#allocation4 + $0x78] sm:$0xff] %vm764, -1e+30
        %781 = vst.msk [vmem:[#allocation5] sm:$0xff] %vm764, 0.0
        %782 = vst.msk [vmem:[#allocation5 + $0x8] sm:$0xff] %vm764, 0.0
        %783 = vst.msk [vmem:[#allocation5 + $0x10] sm:$0xff] %vm764, 0.0
        %784 = vst.msk [vmem:[#allocation5 + $0x18] sm:$0xff] %vm764, 0.0
        %785 = vst.msk [vmem:[#allocation5 + $0x20] sm:$0xff] %vm764, 0.0
        %786 = vst.msk [vmem:[#allocation5 + $0x28] sm:$0xff] %vm764, 0.0
        %787 = vst.msk [vmem:[#allocation5 + $0x30] sm:$0xff] %vm764, 0.0
        %788 = vst.msk [vmem:[#allocation5 + $0x38] sm:$0xff] %vm764, 0.0
        %789 = vst.msk [vmem:[#allocation5 + $0x40] sm:$0xff] %vm764, 0.0
        %790 = vst.msk [vmem:[#allocation5 + $0x48] sm:$0xff] %vm764, 0.0
        %791 = vst.msk [vmem:[#allocation5 + $0x50] sm:$0xff] %vm764, 0.0
        %792 = vst.msk [vmem:[#allocation5 + $0x58] sm:$0xff] %vm764, 0.0
        %793 = vst.msk [vmem:[#allocation5 + $0x60] sm:$0xff] %vm764, 0.0
        %794 = vst.msk [vmem:[#allocation5 + $0x68] sm:$0xff] %vm764, 0.0
        %795 = vst.msk [vmem:[#allocation5 + $0x70] sm:$0xff] %vm764, 0.0
        %796 = vst.msk [vmem:[#allocation5 + $0x78] sm:$0xff] %vm764, 0.0
        %vm797 = vcmask 261120
        %798 = vst.msk [vmem:[#allocation6] sm:$0xff] %vm797, 0.0
        %799 = vst.msk [vmem:[#allocation6 + $0x8] sm:$0xff] %vm797, 0.0
        %800 = vst.msk [vmem:[#allocation6 + $0x10] sm:$0xff] %vm797, 0.0
        %801 = vst.msk [vmem:[#allocation6 + $0x18] sm:$0xff] %vm797, 0.0
        %802 = vst.msk [vmem:[#allocation6 + $0x20] sm:$0xff] %vm797, 0.0
        %803 = vst.msk [vmem:[#allocation6 + $0x28] sm:$0xff] %vm797, 0.0
        %804 = vst.msk [vmem:[#allocation6 + $0x30] sm:$0xff] %vm797, 0.0
        %805 = vst.msk [vmem:[#allocation6 + $0x38] sm:$0xff] %vm797, 0.0
        %806 = vst.msk [vmem:[#allocation6 + $0x40] sm:$0xff] %vm797, 0.0
        %807 = vst.msk [vmem:[#allocation6 + $0x48] sm:$0xff] %vm797, 0.0
        %808 = vst.msk [vmem:[#allocation6 + $0x50] sm:$0xff] %vm797, 0.0
        %809 = vst.msk [vmem:[#allocation6 + $0x58] sm:$0xff] %vm797, 0.0
        %810 = vst.msk [vmem:[#allocation6 + $0x60] sm:$0xff] %vm797, 0.0
        %811 = vst.msk [vmem:[#allocation6 + $0x68] sm:$0xff] %vm797, 0.0
        %812 = vst.msk [vmem:[#allocation6 + $0x70] sm:$0xff] %vm797, 0.0
        %813 = vst.msk [vmem:[#allocation6 + $0x78] sm:$0xff] %vm797, 0.0
        %v814 = vlaneseq
        %v815 = vshrl.u32 %v814, 7
        %v816 = vadd.s32 %v815, 8
        %v817 = vadd.s32 %v815, 16
        %v818 = vadd.s32 %v815, 24
        %v819 = vstv %s315
        %v820 = vadd.s32 %v819, %v815
        %v821 = vadd.s32 %v819, %v816
        %v822 = vadd.s32 %v819, %v817
        %v823 = vadd.s32 %v819, %v818
        %v824 = vlaneseq
        %v825 = vand.u32 %v824, 127
        %s826 = sadd.s32 %s29, 1
        // While loop
        $region65: #{tpu_custom_call.1} parent=39 // loop_pre_header
          _
        $region66: #{tpu_custom_call.1} parent=39 // loop_header
          %s828 = sphi 0, %s830
          %p829 = scmp.ge.s32.totalorder %s828, %s826
        $region67: #{tpu_custom_call.1} parent=39 // loop_header_branch
          %832 = sbr.rel (%p829) target = $region71
        $region68: #{tpu_custom_call.1} parent=39 // loop_body
          %s833 = smul.u32 %s828, 32
          %s834 = sshra.s32 %s833, 4
          %s835 = sand.u32 %s833, 15
          %s836 = smul.addr %s834, 8
          %s837 = scalar_lea.vmem [#allocation2], %s836
          %v838 = vld [vmem:[%s837] sm:$0xff]
          %v839 = vld [vmem:[%s837 + $0x8] sm:$0xff]
          %s840 = smul.addr %s834, 8
          %s841 = scalar_lea.vmem [#allocation3], %s840
          %v842 = vld [vmem:[%s841] sm:$0xff]
          %v843 = vld [vmem:[%s841 + $0x8] sm:$0xff]
          %v844 = vstv %s833
          %v845 = vadd.s32 %v844, %v825
          %vm846 = vcmp.ge.s32.totalorder %v820, %v845
          %vm847 = vcmp.ge.s32.totalorder %v821, %v845
          %vm848 = vcmp.ge.s32.totalorder %v822, %v845
          %vm849 = vcmp.ge.s32.totalorder %v823, %v845
          %v851 = vsel %vm797, %v762, 0
          %v854 = vsel %vm797, %v763, 0
          %v857 = vsel %vm797, %v838, 0
          %v860 = vsel %vm797, %v839, 0
          %862 = vmatprep.subr.bf16.mxu0 0
          %863 = vmatpush1.bf16.xpose.msra.mxu0 %v857
          %864 = vmatprep.subr.bf16.mxu0 0
          %865 = vmatpush1.bf16.xpose.msra.mxu0 %v860
          %866 = vmatprep.subr.bf16.mxu0 0
          %867 = vmatpush1.bf16.xpose.msra.mxu0 0
          %868 = vmatprep.subr.bf16.mxu0 0
          %869 = vmatpush1.bf16.xpose.msra.mxu0 0
          %870 = vmatprep.subr.bf16.mxu0 0
          %871 = vmatpush1.bf16.xpose.msra.mxu0 0
          %872 = vmatprep.subr.bf16.mxu0 0
          %873 = vmatpush1.bf16.xpose.msra.mxu0 0
          %874 = vmatprep.subr.bf16.mxu0 0
          %875 = vmatpush1.bf16.xpose.msra.mxu0 0
          %876 = vmatprep.subr.bf16.mxu0 0
          %877 = vmatpush1.bf16.xpose.msra.mxu0 0
          %878 = vmatprep.subr.bf16.mxu0 0
          %879 = vmatpush1.bf16.xpose.msra.mxu0 0
          %880 = vmatprep.subr.bf16.mxu0 0
          %881 = vmatpush1.bf16.xpose.msra.mxu0 0
          %882 = vmatprep.subr.bf16.mxu0 0
          %883 = vmatpush1.bf16.xpose.msra.mxu0 0
          %884 = vmatprep.subr.bf16.mxu0 0
          %885 = vmatpush1.bf16.xpose.msra.mxu0 0
          %886 = vmatprep.subr.bf16.mxu0 0
          %887 = vmatpush1.bf16.xpose.msra.mxu0 0
          %888 = vmatprep.subr.bf16.mxu0 0
          %889 = vmatpush1.bf16.xpose.msra.mxu0 0
          %890 = vmatprep.subr.bf16.mxu0 0
          %891 = vmatpush1.bf16.xpose.msra.mxu0 0
          %892 = vmatprep.subr.bf16.mxu0 0
          %893 = vmatpush1.bf16.xpose.msra.mxu0 0
          %894 = vmatprep.mubr.bf16.mxu0 0
          %895 = vmatmul.mubr.bf16.gmra.mrb[0].mxu0 %v851
          %v896 = vpop.f32.mrb[0].mxu0
          %v897 = vadd.f32 0.0, %v896
          %v898 = vpop.f32.mrb[0].mxu0
          %v899 = vpop.f32.mrb[0].mxu0
          %v900 = vadd.f32 0.0, %v899
          %v901 = vpop.f32.mrb[0].mxu0
          %902 = vmatprep.mubr.bf16.mxu0 0
          %903 = vmatmul.mubr.bf16.gmra.mrb[0].mxu0 %v854
          %v904 = vpop.f32.mrb[0].mxu0
          %v905 = vadd.f32 0.0, %v904
          %v906 = vpop.f32.mrb[0].mxu0
          %v907 = vpop.f32.mrb[0].mxu0
          %v908 = vadd.f32 0.0, %v907
          %v909 = vpop.f32.mrb[0].mxu0
          %910 = vdwg.mxu0
          %v911 = vsel %vm846, %v897, -1e+30
          %v912 = vsel %vm847, %v900, -1e+30
          %v913 = vsel %vm848, %v905, -1e+30
          %v914 = vsel %vm849, %v908, -1e+30
          %v915 = vld [vmem:[#allocation4] sm:$0xff]
          %v916 = vld [vmem:[#allocation4 + $0x8] sm:$0xff]
          %v917 = vld [vmem:[#allocation4 + $0x10] sm:$0xff]
          %v918 = vld [vmem:[#allocation4 + $0x18] sm:$0xff]
          %v919 = vsel %vm797, %v911, -inf
          %920 = vmax.xlane.f32.xlu0 %v919
          %v921 = vpop.xlane.xlu0 %920
          %v922 = vsel %vm797, %v912, -inf
          %923 = vmax.xlane.f32.xlu0 %v922
          %v924 = vpop.xlane.xlu0 %923
          %v925 = vsel %vm797, %v913, -inf
          %926 = vmax.xlane.f32.xlu0 %v925
          %v927 = vpop.xlane.xlu0 %926
          %v928 = vsel %vm797, %v914, -inf
          %929 = vmax.xlane.f32.xlu0 %v928
          %v930 = vpop.xlane.xlu0 %929
          %v931 = vmax.f32 %v915, %v921
          %v932 = vmax.f32 %v916, %v924
          %v933 = vmax.f32 %v917, %v927
          %v934 = vmax.f32 %v918, %v930
          %v935 = vsub.f32 %v915, %v931
          %v936 = vsub.f32 %v916, %v932
          %v937 = vsub.f32 %v917, %v933
          %v938 = vsub.f32 %v918, %v934
          %v939 = vmul.f32 %v935, 1.442695
          %v940 = vpow.pop %v939
          %v941 = vmul.f32 %v936, 1.442695
          %v942 = vpow.pop %v941
          %v943 = vmul.f32 %v937, 1.442695
          %v944 = vpow.pop %v943
          %v945 = vmul.f32 %v938, 1.442695
          %v946 = vpow.pop %v945
          %948 = vset.pattern.permute.xlu0 0
          %949 = vperm.xlu0 %948, %v931
          %v950 = vpop.permute.xlu0 %949
          %953 = vset.pattern.permute.xlu0 0
          %954 = vperm.xlu0 %953, %v932
          %v955 = vpop.permute.xlu0 %954
          %958 = vset.pattern.permute.xlu0 0
          %959 = vperm.xlu0 %958, %v933
          %v960 = vpop.permute.xlu0 %959
          %963 = vset.pattern.permute.xlu0 0
          %964 = vperm.xlu0 %963, %v934
          %v965 = vpop.permute.xlu0 %964
          %v967 = vsub.f32 %v911, %v950
          %v968 = vsub.f32 %v912, %v955
          %v969 = vsub.f32 %v913, %v960
          %v970 = vsub.f32 %v914, %v965
          %v971 = vmul.f32 %v967, 1.442695
          %v972 = vpow.pop %v971
          %v973 = vmul.f32 %v968, 1.442695
          %v974 = vpow.pop %v973
          %v975 = vmul.f32 %v969, 1.442695
          %v976 = vpow.pop %v975
          %v977 = vmul.f32 %v970, 1.442695
          %v978 = vpow.pop %v977
          %v979 = vld [vmem:[#allocation5] sm:$0xff]
          %v980 = vld [vmem:[#allocation5 + $0x8] sm:$0xff]
          %v981 = vld [vmem:[#allocation5 + $0x10] sm:$0xff]
          %v982 = vld [vmem:[#allocation5 + $0x18] sm:$0xff]
          %v983 = vmul.f32 %v940, %v979
          %v984 = vmul.f32 %v942, %v980
          %v985 = vmul.f32 %v944, %v981
          %v986 = vmul.f32 %v946, %v982
          %v987 = vsel %vm797, %v972, 0.0
          %988 = vadd.xlane.f32.xlu0 %v987
          %v989 = vpop.xlane.xlu0 %988
          %v990 = vsel %vm797, %v974, 0.0
          %991 = vadd.xlane.f32.xlu0 %v990
          %v992 = vpop.xlane.xlu0 %991
          %v993 = vsel %vm797, %v976, 0.0
          %994 = vadd.xlane.f32.xlu0 %v993
          %v995 = vpop.xlane.xlu0 %994
          %v996 = vsel %vm797, %v978, 0.0
          %997 = vadd.xlane.f32.xlu0 %v996
          %v998 = vpop.xlane.xlu0 %997
          %v999 = vadd.f32 %v983, %v989
          %v1000 = vadd.f32 %v984, %v992
          %v1001 = vadd.f32 %v985, %v995
          %v1002 = vadd.f32 %v986, %v998
          %1003 = vst.msk [vmem:[#allocation5] sm:$0xff] %vm764, %v999
          %1004 = vst.msk [vmem:[#allocation5 + $0x8] sm:$0xff] %vm764, %v1000
          %1005 = vst.msk [vmem:[#allocation5 + $0x10] sm:$0xff] %vm764, %v1001
          %1006 = vst.msk [vmem:[#allocation5 + $0x18] sm:$0xff] %vm764, %v1002
          %v1007 = vld [vmem:[#allocation6] sm:$0xff]
          %v1008 = vld [vmem:[#allocation6 + $0x8] sm:$0xff]
          %v1009 = vld [vmem:[#allocation6 + $0x10] sm:$0xff]
          %v1010 = vld [vmem:[#allocation6 + $0x18] sm:$0xff]
          %1012 = vset.pattern.permute.xlu0 0
          %1013 = vperm.xlu0 %1012, %v940
          %v1014 = vpop.permute.xlu0 %1013
          %1017 = vset.pattern.permute.xlu0 0
          %1018 = vperm.xlu0 %1017, %v942
          %v1019 = vpop.permute.xlu0 %1018
          %1022 = vset.pattern.permute.xlu0 0
          %1023 = vperm.xlu0 %1022, %v944
          %v1024 = vpop.permute.xlu0 %1023
          %1027 = vset.pattern.permute.xlu0 0
          %1028 = vperm.xlu0 %1027, %v946
          %v1029 = vpop.permute.xlu0 %1028
          %v1031 = vmul.f32 %v1014, %v1007
          %v1032 = vmul.f32 %v1019, %v1008
          %v1033 = vmul.f32 %v1024, %v1009
          %v1034 = vmul.f32 %v1029, %v1010
          %v1035 = vpack.c.bf16 %v974, %v972
          %v1036 = vpack.c.bf16 %v978, %v976
          %v1038 = vsel %vm797, %v1035, 0
          %v1041 = vsel %vm797, %v1036, 0
          %1043 = vmatprep.subr.bf16.mxu0 0
          %1044 = vmatpush1.bf16.msra.mxu0 %v842
          %1045 = vmatprep.subr.bf16.mxu0 0
          %1046 = vmatpush1.bf16.msra.mxu0 %v843
          %1047 = vmatprep.subr.bf16.mxu0 0
          %1048 = vmatpush1.bf16.msra.mxu0 0
          %1049 = vmatprep.subr.bf16.mxu0 0
          %1050 = vmatpush1.bf16.msra.mxu0 0
          %1051 = vmatprep.subr.bf16.mxu0 0
          %1052 = vmatpush1.bf16.msra.mxu0 0
          %1053 = vmatprep.subr.bf16.mxu0 0
          %1054 = vmatpush1.bf16.msra.mxu0 0
          %1055 = vmatprep.subr.bf16.mxu0 0
          %1056 = vmatpush1.bf16.msra.mxu0 0
          %1057 = vmatprep.subr.bf16.mxu0 0
          %1058 = vmatpush1.bf16.msra.mxu0 0
          %1059 = vmatprep.subr.bf16.mxu0 0
          %1060 = vmatpush1.bf16.msra.mxu0 0
          %1061 = vmatprep.subr.bf16.mxu0 0
          %1062 = vmatpush1.bf16.msra.mxu0 0
          %1063 = vmatprep.subr.bf16.mxu0 0
          %1064 = vmatpush1.bf16.msra.mxu0 0
          %1065 = vmatprep.subr.bf16.mxu0 0
          %1066 = vmatpush1.bf16.msra.mxu0 0
          %1067 = vmatprep.subr.bf16.mxu0 0
          %1068 = vmatpush1.bf16.msra.mxu0 0
          %1069 = vmatprep.subr.bf16.mxu0 0
          %1070 = vmatpush1.bf16.msra.mxu0 0
          %1071 = vmatprep.subr.bf16.mxu0 0
          %1072 = vmatpush1.bf16.msra.mxu0 0
          %1073 = vmatprep.subr.bf16.mxu0 0
          %1074 = vmatpush1.bf16.msra.mxu0 0
          %1075 = vmatprep.mubr.bf16.mxu0 0
          %1076 = vmatmul.mubr.bf16.gmra.mrb[0].mxu0 %v1038
          %v1077 = vpop.f32.mrb[0].mxu0
          %v1078 = vadd.f32 0.0, %v1077
          %v1079 = vpop.f32.mrb[0].mxu0
          %v1080 = vpop.f32.mrb[0].mxu0
          %v1081 = vadd.f32 0.0, %v1080
          %v1082 = vpop.f32.mrb[0].mxu0
          %1083 = vmatprep.mubr.bf16.mxu0 0
          %1084 = vmatmul.mubr.bf16.gmra.mrb[0].mxu0 %v1041
          %v1085 = vpop.f32.mrb[0].mxu0
          %v1086 = vadd.f32 0.0, %v1085
          %v1087 = vpop.f32.mrb[0].mxu0
          %v1088 = vpop.f32.mrb[0].mxu0
          %v1089 = vadd.f32 0.0, %v1088
          %v1090 = vpop.f32.mrb[0].mxu0
          %1091 = vdwg.mxu0
          %v1092 = vadd.f32 %v1031, %v1078
          %v1093 = vadd.f32 %v1032, %v1081
          %v1094 = vadd.f32 %v1033, %v1086
          %v1095 = vadd.f32 %v1034, %v1089
          %1096 = vst.msk [vmem:[#allocation6] sm:$0xff] %vm797, %v1092
          %1097 = vst.msk [vmem:[#allocation6 + $0x8] sm:$0xff] %vm797, %v1093
          %1098 = vst.msk [vmem:[#allocation6 + $0x10] sm:$0xff] %vm797, %v1094
          %1099 = vst.msk [vmem:[#allocation6 + $0x18] sm:$0xff] %vm797, %v1095
          %1100 = vst.msk [vmem:[#allocation4] sm:$0xff] %vm764, %v931
          %1101 = vst.msk [vmem:[#allocation4 + $0x8] sm:$0xff] %vm764, %v932
          %1102 = vst.msk [vmem:[#allocation4 + $0x10] sm:$0xff] %vm764, %v933
          %1103 = vst.msk [vmem:[#allocation4 + $0x18] sm:$0xff] %vm764, %v934
          %1106 = vrot.lane.b32.xlu0 %v762, 96
          %v1107 = vpop.permute.xlu0 %1106
          %1108 = vrot.lane.b32.xlu0 %v763, 96
          %v1109 = vpop.permute.xlu0 %1108
          %1112 = vrot.lane.b32.xlu0 %v838, 96
          %v1113 = vpop.permute.xlu0 %1112
          %1114 = vrot.lane.b32.xlu0 %v839, 96
          %v1115 = vpop.permute.xlu0 %1114
          %v1117 = vsel %vm797, %v1107, 0
          %v1120 = vsel %vm797, %v1109, 0
          %v1123 = vsel %vm797, %v1113, 0
          %v1126 = vsel %vm797, %v1115, 0
          %1128 = vmatprep.subr.bf16.mxu0 0
          %1129 = vmatpush1.bf16.xpose.msra.mxu0 %v1123
          %1130 = vmatprep.subr.bf16.mxu0 0
          %1131 = vmatpush1.bf16.xpose.msra.mxu0 %v1126
          %1132 = vmatprep.subr.bf16.mxu0 0
          %1133 = vmatpush1.bf16.xpose.msra.mxu0 0
          %1134 = vmatprep.subr.bf16.mxu0 0
          %1135 = vmatpush1.bf16.xpose.msra.mxu0 0
          %1136 = vmatprep.subr.bf16.mxu0 0
          %1137 = vmatpush1.bf16.xpose.msra.mxu0 0
          %1138 = vmatprep.subr.bf16.mxu0 0
          %1139 = vmatpush1.bf16.xpose.msra.mxu0 0
          %1140 = vmatprep.subr.bf16.mxu0 0
          %1141 = vmatpush1.bf16.xpose.msra.mxu0 0
          %1142 = vmatprep.subr.bf16.mxu0 0
          %1143 = vmatpush1.bf16.xpose.msra.mxu0 0
          %1144 = vmatprep.subr.bf16.mxu0 0
          %1145 = vmatpush1.bf16.xpose.msra.mxu0 0
          %1146 = vmatprep.subr.bf16.mxu0 0
          %1147 = vmatpush1.bf16.xpose.msra.mxu0 0
          %1148 = vmatprep.subr.bf16.mxu0 0
          %1149 = vmatpush1.bf16.xpose.msra.mxu0 0
          %1150 = vmatprep.subr.bf16.mxu0 0
          %1151 = vmatpush1.bf16.xpose.msra.mxu0 0
          %1152 = vmatprep.subr.bf16.mxu0 0
          %1153 = vmatpush1.bf16.xpose.msra.mxu0 0
          %1154 = vmatprep.subr.bf16.mxu0 0
          %1155 = vmatpush1.bf16.xpose.msra.mxu0 0
          %1156 = vmatprep.subr.bf16.mxu0 0
          %1157 = vmatpush1.bf16.xpose.msra.mxu0 0
          %1158 = vmatprep.subr.bf16.mxu0 0
          %1159 = vmatpush1.bf16.xpose.msra.mxu0 0
          %1160 = vmatprep.mubr.bf16.mxu0 0
          %1161 = vmatmul.mubr.bf16.gmra.mrb[0].mxu0 %v1117
          %v1162 = vpop.f32.mrb[0].mxu0
          %v1163 = vadd.f32 0.0, %v1162
          %v1164 = vpop.f32.mrb[0].mxu0
          %v1165 = vpop.f32.mrb[0].mxu0
          %v1166 = vadd.f32 0.0, %v1165
          %v1167 = vpop.f32.mrb[0].mxu0
          %1168 = vmatprep.mubr.bf16.mxu0 0
          %1169 = vmatmul.mubr.bf16.gmra.mrb[0].mxu0 %v1120
          %v1170 = vpop.f32.mrb[0].mxu0
          %v1171 = vadd.f32 0.0, %v1170
          %v1172 = vpop.f32.mrb[0].mxu0
          %v1173 = vpop.f32.mrb[0].mxu0
          %v1174 = vadd.f32 0.0, %v1173
          %v1175 = vpop.f32.mrb[0].mxu0
          %1176 = vdwg.mxu0
          %v1177 = vsel %vm846, %v1163, -1e+30
          %v1178 = vsel %vm847, %v1166, -1e+30
          %v1179 = vsel %vm848, %v1171, -1e+30
          %v1180 = vsel %vm849, %v1174, -1e+30
          %s1181 = scalar_lea.vmem [#allocation4], 32
          %v1182 = vld [vmem:[%s1181] sm:$0xff]
          %v1183 = vld [vmem:[%s1181 + $0x8] sm:$0xff]
          %v1184 = vld [vmem:[%s1181 + $0x10] sm:$0xff]
          %v1185 = vld [vmem:[%s1181 + $0x18] sm:$0xff]
          %v1186 = vsel %vm797, %v1177, -inf
          %1187 = vmax.xlane.f32.xlu0 %v1186
          %v1188 = vpop.xlane.xlu0 %1187
          %v1189 = vsel %vm797, %v1178, -inf
          %1190 = vmax.xlane.f32.xlu0 %v1189
          %v1191 = vpop.xlane.xlu0 %1190
          %v1192 = vsel %vm797, %v1179, -inf
          %1193 = vmax.xlane.f32.xlu0 %v1192
          %v1194 = vpop.xlane.xlu0 %1193
          %v1195 = vsel %vm797, %v1180, -inf
          %1196 = vmax.xlane.f32.xlu0 %v1195
          %v1197 = vpop.xlane.xlu0 %1196
          %v1198 = vmax.f32 %v1182, %v1188
          %v1199 = vmax.f32 %v1183, %v1191
          %v1200 = vmax.f32 %v1184, %v1194
          %v1201 = vmax.f32 %v1185, %v1197
          %v1202 = vsub.f32 %v1182, %v1198
          %v1203 = vsub.f32 %v1183, %v1199
          %v1204 = vsub.f32 %v1184, %v1200
          %v1205 = vsub.f32 %v1185, %v1201
          %v1206 = vmul.f32 %v1202, 1.442695
          %v1207 = vpow.pop %v1206
          %v1208 = vmul.f32 %v1203, 1.442695
          %v1209 = vpow.pop %v1208
          %v1210 = vmul.f32 %v1204, 1.442695
          %v1211 = vpow.pop %v1210
          %v1212 = vmul.f32 %v1205, 1.442695
          %v1213 = vpow.pop %v1212
          %1215 = vset.pattern.permute.xlu0 0
          %1216 = vperm.xlu0 %1215, %v1198
          %v1217 = vpop.permute.xlu0 %1216
          %1220 = vset.pattern.permute.xlu0 0
          %1221 = vperm.xlu0 %1220, %v1199
          %v1222 = vpop.permute.xlu0 %1221
          %1225 = vset.pattern.permute.xlu0 0
          %1226 = vperm.xlu0 %1225, %v1200
          %v1227 = vpop.permute.xlu0 %1226
          %1230 = vset.pattern.permute.xlu0 0
          %1231 = vperm.xlu0 %1230, %v1201
          %v1232 = vpop.permute.xlu0 %1231
          %v1234 = vsub.f32 %v1177, %v1217
          %v1235 = vsub.f32 %v1178, %v1222
          %v1236 = vsub.f32 %v1179, %v1227
          %v1237 = vsub.f32 %v1180, %v1232
          %v1238 = vmul.f32 %v1234, 1.442695
          %v1239 = vpow.pop %v1238
          %v1240 = vmul.f32 %v1235, 1.442695
          %v1241 = vpow.pop %v1240
          %v1242 = vmul.f32 %v1236, 1.442695
          %v1243 = vpow.pop %v1242
          %v1244 = vmul.f32 %v1237, 1.442695
          %v1245 = vpow.pop %v1244
          %s1246 = scalar_lea.vmem [#allocation5], 32
          %v1247 = vld [vmem:[%s1246] sm:$0xff]
          %v1248 = vld [vmem:[%s1246 + $0x8] sm:$0xff]
          %v1249 = vld [vmem:[%s1246 + $0x10] sm:$0xff]
          %v1250 = vld [vmem:[%s1246 + $0x18] sm:$0xff]
          %v1251 = vmul.f32 %v1207, %v1247
          %v1252 = vmul.f32 %v1209, %v1248
          %v1253 = vmul.f32 %v1211, %v1249
          %v1254 = vmul.f32 %v1213, %v1250
          %v1255 = vsel %vm797, %v1239, 0.0
          %1256 = vadd.xlane.f32.xlu0 %v1255
          %v1257 = vpop.xlane.xlu0 %1256
          %v1258 = vsel %vm797, %v1241, 0.0
          %1259 = vadd.xlane.f32.xlu0 %v1258
          %v1260 = vpop.xlane.xlu0 %1259
          %v1261 = vsel %vm797, %v1243, 0.0
          %1262 = vadd.xlane.f32.xlu0 %v1261
          %v1263 = vpop.xlane.xlu0 %1262
          %v1264 = vsel %vm797, %v1245, 0.0
          %1265 = vadd.xlane.f32.xlu0 %v1264
          %v1266 = vpop.xlane.xlu0 %1265
          %v1267 = vadd.f32 %v1251, %v1257
          %v1268 = vadd.f32 %v1252, %v1260
          %v1269 = vadd.f32 %v1253, %v1263
          %v1270 = vadd.f32 %v1254, %v1266
          %1271 = vst.msk [vmem:[%s1246] sm:$0xff] %vm764, %v1267
          %1272 = vst.msk [vmem:[%s1246 + $0x8] sm:$0xff] %vm764, %v1268
          %1273 = vst.msk [vmem:[%s1246 + $0x10] sm:$0xff] %vm764, %v1269
          %1274 = vst.msk [vmem:[%s1246 + $0x18] sm:$0xff] %vm764, %v1270
          %s1275 = scalar_lea.vmem [#allocation6], 32
          %v1276 = vld [vmem:[%s1275] sm:$0xff]
          %v1277 = vld [vmem:[%s1275 + $0x8] sm:$0xff]
          %v1278 = vld [vmem:[%s1275 + $0x10] sm:$0xff]
          %v1279 = vld [vmem:[%s1275 + $0x18] sm:$0xff]
          %1281 = vset.pattern.permute.xlu0 0
          %1282 = vperm.xlu0 %1281, %v1207
          %v1283 = vpop.permute.xlu0 %1282
          %1286 = vset.pattern.permute.xlu0 0
          %1287 = vperm.xlu0 %1286, %v1209
          %v1288 = vpop.permute.xlu0 %1287
          %1291 = vset.pattern.permute.xlu0 0
          %1292 = vperm.xlu0 %1291, %v1211
          %v1293 = vpop.permute.xlu0 %1292
          %1296 = vset.pattern.permute.xlu0 0
          %1297 = vperm.xlu0 %1296, %v1213
          %v1298 = vpop.permute.xlu0 %1297
          %v1300 = vmul.f32 %v1283, %v1276
          %v1301 = vmul.f32 %v1288, %v1277
          %v1302 = vmul.f32 %v1293, %v1278
          %v1303 = vmul.f32 %v1298, %v1279
          %v1304 = vpack.c.bf16 %v1241, %v1239
          %v1305 = vpack.c.bf16 %v1245, %v1243
          %1308 = vrot.lane.b32.xlu0 %v842, 96
          %v1309 = vpop.permute.xlu0 %1308
          %1310 = vrot.lane.b32.xlu0 %v843, 96
          %v1311 = vpop.permute.xlu0 %1310
          %v1315 = vsel %vm797, %v1304, 0
          %v1318 = vsel %vm797, %v1305, 0
          %1320 = vmatprep.subr.bf16.mxu0 0
          %1321 = vmatpush1.bf16.msra.mxu0 %v1309
          %1322 = vmatprep.subr.bf16.mxu0 0
          %1323 = vmatpush1.bf16.msra.mxu0 %v1311
          %1324 = vmatprep.subr.bf16.mxu0 0
          %1325 = vmatpush1.bf16.msra.mxu0 0
          %1326 = vmatprep.subr.bf16.mxu0 0
          %1327 = vmatpush1.bf16.msra.mxu0 0
          %1328 = vmatprep.subr.bf16.mxu0 0
          %1329 = vmatpush1.bf16.msra.mxu0 0
          %1330 = vmatprep.subr.bf16.mxu0 0
          %1331 = vmatpush1.bf16.msra.mxu0 0
          %1332 = vmatprep.subr.bf16.mxu0 0
          %1333 = vmatpush1.bf16.msra.mxu0 0
          %1334 = vmatprep.subr.bf16.mxu0 0
          %1335 = vmatpush1.bf16.msra.mxu0 0
          %1336 = vmatprep.subr.bf16.mxu0 0
          %1337 = vmatpush1.bf16.msra.mxu0 0
          %1338 = vmatprep.subr.bf16.mxu0 0
          %1339 = vmatpush1.bf16.msra.mxu0 0
          %1340 = vmatprep.subr.bf16.mxu0 0
          %1341 = vmatpush1.bf16.msra.mxu0 0
          %1342 = vmatprep.subr.bf16.mxu0 0
          %1343 = vmatpush1.bf16.msra.mxu0 0
          %1344 = vmatprep.subr.bf16.mxu0 0
          %1345 = vmatpush1.bf16.msra.mxu0 0
          %1346 = vmatprep.subr.bf16.mxu0 0
          %1347 = vmatpush1.bf16.msra.mxu0 0
          %1348 = vmatprep.subr.bf16.mxu0 0
          %1349 = vmatpush1.bf16.msra.mxu0 0
          %1350 = vmatprep.subr.bf16.mxu0 0
          %1351 = vmatpush1.bf16.msra.mxu0 0
          %1352 = vmatprep.mubr.bf16.mxu0 0
          %1353 = vmatmul.mubr.bf16.gmra.mrb[0].mxu0 %v1315
          %v1354 = vpop.f32.mrb[0].mxu0
          %v1355 = vadd.f32 0.0, %v1354
          %v1356 = vpop.f32.mrb[0].mxu0
          %v1357 = vpop.f32.mrb[0].mxu0
          %v1358 = vadd.f32 0.0, %v1357
          %v1359 = vpop.f32.mrb[0].mxu0
          %1360 = vmatprep.mubr.bf16.mxu0 0
          %1361 = vmatmul.mubr.bf16.gmra.mrb[0].mxu0 %v1318
          %v1362 = vpop.f32.mrb[0].mxu0
          %v1363 = vadd.f32 0.0, %v1362
          %v1364 = vpop.f32.mrb[0].mxu0
          %v1365 = vpop.f32.mrb[0].mxu0
          %v1366 = vadd.f32 0.0, %v1365
          %v1367 = vpop.f32.mrb[0].mxu0
          %1368 = vdwg.mxu0
          %v1369 = vadd.f32 %v1300, %v1355
          %v1370 = vadd.f32 %v1301, %v1358
          %v1371 = vadd.f32 %v1302, %v1363
          %v1372 = vadd.f32 %v1303, %v1366
          %1373 = vst.msk [vmem:[%s1275] sm:$0xff] %vm797, %v1369
          %1374 = vst.msk [vmem:[%s1275 + $0x8] sm:$0xff] %vm797, %v1370
          %1375 = vst.msk [vmem:[%s1275 + $0x10] sm:$0xff] %vm797, %v1371
          %1376 = vst.msk [vmem:[%s1275 + $0x18] sm:$0xff] %vm797, %v1372
          %1377 = vst.msk [vmem:[%s1181] sm:$0xff] %vm764, %v1198
          %1378 = vst.msk [vmem:[%s1181 + $0x8] sm:$0xff] %vm764, %v1199
          %1379 = vst.msk [vmem:[%s1181 + $0x10] sm:$0xff] %vm764, %v1200
          %1380 = vst.msk [vmem:[%s1181 + $0x18] sm:$0xff] %vm764, %v1201
          %1381 = vrot.lane.b32.xlu0 %v762, 64
          %v1382 = vpop.permute.xlu0 %1381
          %1383 = vrot.lane.b32.xlu0 %v763, 64
          %v1384 = vpop.permute.xlu0 %1383
          %1385 = vrot.lane.b32.xlu0 %v838, 64
          %v1386 = vpop.permute.xlu0 %1385
          %1387 = vrot.lane.b32.xlu0 %v839, 64
          %v1388 = vpop.permute.xlu0 %1387
          %v1390 = vsel %vm797, %v1382, 0
          %v1393 = vsel %vm797, %v1384, 0
          %v1396 = vsel %vm797, %v1386, 0
          %v1399 = vsel %vm797, %v1388, 0
          %1401 = vmatprep.subr.bf16.mxu0 0
          %1402 = vmatpush1.bf16.xpose.msra.mxu0 %v1396
          %1403 = vmatprep.subr.bf16.mxu0 0
          %1404 = vmatpush1.bf16.xpose.msra.mxu0 %v1399
          %1405 = vmatprep.subr.bf16.mxu0 0
          %1406 = vmatpush1.bf16.xpose.msra.mxu0 0
          %1407 = vmatprep.subr.bf16.mxu0 0
          %1408 = vmatpush1.bf16.xpose.msra.mxu0 0
          %1409 = vmatprep.subr.bf16.mxu0 0
          %1410 = vmatpush1.bf16.xpose.msra.mxu0 0
          %1411 = vmatprep.subr.bf16.mxu0 0
          %1412 = vmatpush1.bf16.xpose.msra.mxu0 0
          %1413 = vmatprep.subr.bf16.mxu0 0
          %1414 = vmatpush1.bf16.xpose.msra.mxu0 0
          %1415 = vmatprep.subr.bf16.mxu0 0
          %1416 = vmatpush1.bf16.xpose.msra.mxu0 0
          %1417 = vmatprep.subr.bf16.mxu0 0
          %1418 = vmatpush1.bf16.xpose.msra.mxu0 0
          %1419 = vmatprep.subr.bf16.mxu0 0
          %1420 = vmatpush1.bf16.xpose.msra.mxu0 0
          %1421 = vmatprep.subr.bf16.mxu0 0
          %1422 = vmatpush1.bf16.xpose.msra.mxu0 0
          %1423 = vmatprep.subr.bf16.mxu0 0
          %1424 = vmatpush1.bf16.xpose.msra.mxu0 0
          %1425 = vmatprep.subr.bf16.mxu0 0
          %1426 = vmatpush1.bf16.xpose.msra.mxu0 0
          %1427 = vmatprep.subr.bf16.mxu0 0
          %1428 = vmatpush1.bf16.xpose.msra.mxu0 0
          %1429 = vmatprep.subr.bf16.mxu0 0
          %1430 = vmatpush1.bf16.xpose.msra.mxu0 0
          %1431 = vmatprep.subr.bf16.mxu0 0
          %1432 = vmatpush1.bf16.xpose.msra.mxu0 0
          %1433 = vmatprep.mubr.bf16.mxu0 0
          %1434 = vmatmul.mubr.bf16.gmra.mrb[0].mxu0 %v1390
          %v1435 = vpop.f32.mrb[0].mxu0
          %v1436 = vadd.f32 0.0, %v1435
          %v1437 = vpop.f32.mrb[0].mxu0
          %v1438 = vpop.f32.mrb[0].mxu0
          %v1439 = vadd.f32 0.0, %v1438
          %v1440 = vpop.f32.mrb[0].mxu0
          %1441 = vmatprep.mubr.bf16.mxu0 0
          %1442 = vmatmul.mubr.bf16.gmra.mrb[0].mxu0 %v1393
          %v1443 = vpop.f32.mrb[0].mxu0
          %v1444 = vadd.f32 0.0, %v1443
          %v1445 = vpop.f32.mrb[0].mxu0
          %v1446 = vpop.f32.mrb[0].mxu0
          %v1447 = vadd.f32 0.0, %v1446
          %v1448 = vpop.f32.mrb[0].mxu0
          %1449 = vdwg.mxu0
          %v1450 = vsel %vm846, %v1436, -1e+30
          %v1451 = vsel %vm847, %v1439, -1e+30
          %v1452 = vsel %vm848, %v1444, -1e+30
          %v1453 = vsel %vm849, %v1447, -1e+30
          %s1454 = scalar_lea.vmem [#allocation4], 64
          %v1455 = vld [vmem:[%s1454] sm:$0xff]
          %v1456 = vld [vmem:[%s1454 + $0x8] sm:$0xff]
          %v1457 = vld [vmem:[%s1454 + $0x10] sm:$0xff]
          %v1458 = vld [vmem:[%s1454 + $0x18] sm:$0xff]
          %v1459 = vsel %vm797, %v1450, -inf
          %1460 = vmax.xlane.f32.xlu0 %v1459
          %v1461 = vpop.xlane.xlu0 %1460
          %v1462 = vsel %vm797, %v1451, -inf
          %1463 = vmax.xlane.f32.xlu0 %v1462
          %v1464 = vpop.xlane.xlu0 %1463
          %v1465 = vsel %vm797, %v1452, -inf
          %1466 = vmax.xlane.f32.xlu0 %v1465
          %v1467 = vpop.xlane.xlu0 %1466
          %v1468 = vsel %vm797, %v1453, -inf
          %1469 = vmax.xlane.f32.xlu0 %v1468
          %v1470 = vpop.xlane.xlu0 %1469
          %v1471 = vmax.f32 %v1455, %v1461
          %v1472 = vmax.f32 %v1456, %v1464
          %v1473 = vmax.f32 %v1457, %v1467
          %v1474 = vmax.f32 %v1458, %v1470
          %v1475 = vsub.f32 %v1455, %v1471
          %v1476 = vsub.f32 %v1456, %v1472
          %v1477 = vsub.f32 %v1457, %v1473
          %v1478 = vsub.f32 %v1458, %v1474
          %v1479 = vmul.f32 %v1475, 1.442695
          %v1480 = vpow.pop %v1479
          %v1481 = vmul.f32 %v1476, 1.442695
          %v1482 = vpow.pop %v1481
          %v1483 = vmul.f32 %v1477, 1.442695
          %v1484 = vpow.pop %v1483
          %v1485 = vmul.f32 %v1478, 1.442695
          %v1486 = vpow.pop %v1485
          %1488 = vset.pattern.permute.xlu0 0
          %1489 = vperm.xlu0 %1488, %v1471
          %v1490 = vpop.permute.xlu0 %1489
          %1493 = vset.pattern.permute.xlu0 0
          %1494 = vperm.xlu0 %1493, %v1472
          %v1495 = vpop.permute.xlu0 %1494
          %1498 = vset.pattern.permute.xlu0 0
          %1499 = vperm.xlu0 %1498, %v1473
          %v1500 = vpop.permute.xlu0 %1499
          %1503 = vset.pattern.permute.xlu0 0
          %1504 = vperm.xlu0 %1503, %v1474
          %v1505 = vpop.permute.xlu0 %1504
          %v1507 = vsub.f32 %v1450, %v1490
          %v1508 = vsub.f32 %v1451, %v1495
          %v1509 = vsub.f32 %v1452, %v1500
          %v1510 = vsub.f32 %v1453, %v1505
          %v1511 = vmul.f32 %v1507, 1.442695
          %v1512 = vpow.pop %v1511
          %v1513 = vmul.f32 %v1508, 1.442695
          %v1514 = vpow.pop %v1513
          %v1515 = vmul.f32 %v1509, 1.442695
          %v1516 = vpow.pop %v1515
          %v1517 = vmul.f32 %v1510, 1.442695
          %v1518 = vpow.pop %v1517
          %s1519 = scalar_lea.vmem [#allocation5], 64
          %v1520 = vld [vmem:[%s1519] sm:$0xff]
          %v1521 = vld [vmem:[%s1519 + $0x8] sm:$0xff]
          %v1522 = vld [vmem:[%s1519 + $0x10] sm:$0xff]
          %v1523 = vld [vmem:[%s1519 + $0x18] sm:$0xff]
          %v1524 = vmul.f32 %v1480, %v1520
          %v1525 = vmul.f32 %v1482, %v1521
          %v1526 = vmul.f32 %v1484, %v1522
          %v1527 = vmul.f32 %v1486, %v1523
          %v1528 = vsel %vm797, %v1512, 0.0
          %1529 = vadd.xlane.f32.xlu0 %v1528
          %v1530 = vpop.xlane.xlu0 %1529
          %v1531 = vsel %vm797, %v1514, 0.0
          %1532 = vadd.xlane.f32.xlu0 %v1531
          %v1533 = vpop.xlane.xlu0 %1532
          %v1534 = vsel %vm797, %v1516, 0.0
          %1535 = vadd.xlane.f32.xlu0 %v1534
          %v1536 = vpop.xlane.xlu0 %1535
          %v1537 = vsel %vm797, %v1518, 0.0
          %1538 = vadd.xlane.f32.xlu0 %v1537
          %v1539 = vpop.xlane.xlu0 %1538
          %v1540 = vadd.f32 %v1524, %v1530
          %v1541 = vadd.f32 %v1525, %v1533
          %v1542 = vadd.f32 %v1526, %v1536
          %v1543 = vadd.f32 %v1527, %v1539
          %1544 = vst.msk [vmem:[%s1519] sm:$0xff] %vm764, %v1540
          %1545 = vst.msk [vmem:[%s1519 + $0x8] sm:$0xff] %vm764, %v1541
          %1546 = vst.msk [vmem:[%s1519 + $0x10] sm:$0xff] %vm764, %v1542
          %1547 = vst.msk [vmem:[%s1519 + $0x18] sm:$0xff] %vm764, %v1543
          %s1548 = scalar_lea.vmem [#allocation6], 64
          %v1549 = vld [vmem:[%s1548] sm:$0xff]
          %v1550 = vld [vmem:[%s1548 + $0x8] sm:$0xff]
          %v1551 = vld [vmem:[%s1548 + $0x10] sm:$0xff]
          %v1552 = vld [vmem:[%s1548 + $0x18] sm:$0xff]
          %1554 = vset.pattern.permute.xlu0 0
          %1555 = vperm.xlu0 %1554, %v1480
          %v1556 = vpop.permute.xlu0 %1555
          %1559 = vset.pattern.permute.xlu0 0
          %1560 = vperm.xlu0 %1559, %v1482
          %v1561 = vpop.permute.xlu0 %1560
          %1564 = vset.pattern.permute.xlu0 0
          %1565 = vperm.xlu0 %1564, %v1484
          %v1566 = vpop.permute.xlu0 %1565
          %1569 = vset.pattern.permute.xlu0 0
          %1570 = vperm.xlu0 %1569, %v1486
          %v1571 = vpop.permute.xlu0 %1570
          %v1573 = vmul.f32 %v1556, %v1549
          %v1574 = vmul.f32 %v1561, %v1550
          %v1575 = vmul.f32 %v1566, %v1551
          %v1576 = vmul.f32 %v1571, %v1552
          %v1577 = vpack.c.bf16 %v1514, %v1512
          %v1578 = vpack.c.bf16 %v1518, %v1516
          %1579 = vrot.lane.b32.xlu0 %v842, 64
          %v1580 = vpop.permute.xlu0 %1579
          %1581 = vrot.lane.b32.xlu0 %v843, 64
          %v1582 = vpop.permute.xlu0 %1581
          %v1586 = vsel %vm797, %v1577, 0
          %v1589 = vsel %vm797, %v1578, 0
          %1591 = vmatprep.subr.bf16.mxu0 0
          %1592 = vmatpush1.bf16.msra.mxu0 %v1580
          %1593 = vmatprep.subr.bf16.mxu0 0
          %1594 = vmatpush1.bf16.msra.mxu0 %v1582
          %1595 = vmatprep.subr.bf16.mxu0 0
          %1596 = vmatpush1.bf16.msra.mxu0 0
          %1597 = vmatprep.subr.bf16.mxu0 0
          %1598 = vmatpush1.bf16.msra.mxu0 0
          %1599 = vmatprep.subr.bf16.mxu0 0
          %1600 = vmatpush1.bf16.msra.mxu0 0
          %1601 = vmatprep.subr.bf16.mxu0 0
          %1602 = vmatpush1.bf16.msra.mxu0 0
          %1603 = vmatprep.subr.bf16.mxu0 0
          %1604 = vmatpush1.bf16.msra.mxu0 0
          %1605 = vmatprep.subr.bf16.mxu0 0
          %1606 = vmatpush1.bf16.msra.mxu0 0
          %1607 = vmatprep.subr.bf16.mxu0 0
          %1608 = vmatpush1.bf16.msra.mxu0 0
          %1609 = vmatprep.subr.bf16.mxu0 0
          %1610 = vmatpush1.bf16.msra.mxu0 0
          %1611 = vmatprep.subr.bf16.mxu0 0
          %1612 = vmatpush1.bf16.msra.mxu0 0
          %1613 = vmatprep.subr.bf16.mxu0 0
          %1614 = vmatpush1.bf16.msra.mxu0 0
          %1615 = vmatprep.subr.bf16.mxu0 0
          %1616 = vmatpush1.bf16.msra.mxu0 0
          %1617 = vmatprep.subr.bf16.mxu0 0
          %1618 = vmatpush1.bf16.msra.mxu0 0
          %1619 = vmatprep.subr.bf16.mxu0 0
          %1620 = vmatpush1.bf16.msra.mxu0 0
          %1621 = vmatprep.subr.bf16.mxu0 0
          %1622 = vmatpush1.bf16.msra.mxu0 0
          %1623 = vmatprep.mubr.bf16.mxu0 0
          %1624 = vmatmul.mubr.bf16.gmra.mrb[0].mxu0 %v1586
          %v1625 = vpop.f32.mrb[0].mxu0
          %v1626 = vadd.f32 0.0, %v1625
          %v1627 = vpop.f32.mrb[0].mxu0
          %v1628 = vpop.f32.mrb[0].mxu0
          %v1629 = vadd.f32 0.0, %v1628
          %v1630 = vpop.f32.mrb[0].mxu0
          %1631 = vmatprep.mubr.bf16.mxu0 0
          %1632 = vmatmul.mubr.bf16.gmra.mrb[0].mxu0 %v1589
          %v1633 = vpop.f32.mrb[0].mxu0
          %v1634 = vadd.f32 0.0, %v1633
          %v1635 = vpop.f32.mrb[0].mxu0
          %v1636 = vpop.f32.mrb[0].mxu0
          %v1637 = vadd.f32 0.0, %v1636
          %v1638 = vpop.f32.mrb[0].mxu0
          %1639 = vdwg.mxu0
          %v1640 = vadd.f32 %v1573, %v1626
          %v1641 = vadd.f32 %v1574, %v1629
          %v1642 = vadd.f32 %v1575, %v1634
          %v1643 = vadd.f32 %v1576, %v1637
          %1644 = vst.msk [vmem:[%s1548] sm:$0xff] %vm797, %v1640
          %1645 = vst.msk [vmem:[%s1548 + $0x8] sm:$0xff] %vm797, %v1641
          %1646 = vst.msk [vmem:[%s1548 + $0x10] sm:$0xff] %vm797, %v1642
          %1647 = vst.msk [vmem:[%s1548 + $0x18] sm:$0xff] %vm797, %v1643
          %1648 = vst.msk [vmem:[%s1454] sm:$0xff] %vm764, %v1471
          %1649 = vst.msk [vmem:[%s1454 + $0x8] sm:$0xff] %vm764, %v1472
          %1650 = vst.msk [vmem:[%s1454 + $0x10] sm:$0xff] %vm764, %v1473
          %1651 = vst.msk [vmem:[%s1454 + $0x18] sm:$0xff] %vm764, %v1474
          %1652 = vrot.lane.b32.xlu0 %v762, 32
          %v1653 = vpop.permute.xlu0 %1652
          %1654 = vrot.lane.b32.xlu0 %v763, 32
          %v1655 = vpop.permute.xlu0 %1654
          %1656 = vrot.lane.b32.xlu0 %v838, 32
          %v1657 = vpop.permute.xlu0 %1656
          %1658 = vrot.lane.b32.xlu0 %v839, 32
          %v1659 = vpop.permute.xlu0 %1658
          %v1661 = vsel %vm797, %v1653, 0
          %v1664 = vsel %vm797, %v1655, 0
          %v1667 = vsel %vm797, %v1657, 0
          %v1670 = vsel %vm797, %v1659, 0
          %1672 = vmatprep.subr.bf16.mxu0 0
          %1673 = vmatpush1.bf16.xpose.msra.mxu0 %v1667
          %1674 = vmatprep.subr.bf16.mxu0 0
          %1675 = vmatpush1.bf16.xpose.msra.mxu0 %v1670
          %1676 = vmatprep.subr.bf16.mxu0 0
          %1677 = vmatpush1.bf16.xpose.msra.mxu0 0
          %1678 = vmatprep.subr.bf16.mxu0 0
          %1679 = vmatpush1.bf16.xpose.msra.mxu0 0
          %1680 = vmatprep.subr.bf16.mxu0 0
          %1681 = vmatpush1.bf16.xpose.msra.mxu0 0
          %1682 = vmatprep.subr.bf16.mxu0 0
          %1683 = vmatpush1.bf16.xpose.msra.mxu0 0
          %1684 = vmatprep.subr.bf16.mxu0 0
          %1685 = vmatpush1.bf16.xpose.msra.mxu0 0
          %1686 = vmatprep.subr.bf16.mxu0 0
          %1687 = vmatpush1.bf16.xpose.msra.mxu0 0
          %1688 = vmatprep.subr.bf16.mxu0 0
          %1689 = vmatpush1.bf16.xpose.msra.mxu0 0
          %1690 = vmatprep.subr.bf16.mxu0 0
          %1691 = vmatpush1.bf16.xpose.msra.mxu0 0
          %1692 = vmatprep.subr.bf16.mxu0 0
          %1693 = vmatpush1.bf16.xpose.msra.mxu0 0
          %1694 = vmatprep.subr.bf16.mxu0 0
          %1695 = vmatpush1.bf16.xpose.msra.mxu0 0
          %1696 = vmatprep.subr.bf16.mxu0 0
          %1697 = vmatpush1.bf16.xpose.msra.mxu0 0
          %1698 = vmatprep.subr.bf16.mxu0 0
          %1699 = vmatpush1.bf16.xpose.msra.mxu0 0
          %1700 = vmatprep.subr.bf16.mxu0 0
          %1701 = vmatpush1.bf16.xpose.msra.mxu0 0
          %1702 = vmatprep.subr.bf16.mxu0 0
          %1703 = vmatpush1.bf16.xpose.msra.mxu0 0
          %1704 = vmatprep.mubr.bf16.mxu0 0
          %1705 = vmatmul.mubr.bf16.gmra.mrb[0].mxu0 %v1661
          %v1706 = vpop.f32.mrb[0].mxu0
          %v1707 = vadd.f32 0.0, %v1706
          %v1708 = vpop.f32.mrb[0].mxu0
          %v1709 = vpop.f32.mrb[0].mxu0
          %v1710 = vadd.f32 0.0, %v1709
          %v1711 = vpop.f32.mrb[0].mxu0
          %1712 = vmatprep.mubr.bf16.mxu0 0
          %1713 = vmatmul.mubr.bf16.gmra.mrb[0].mxu0 %v1664
          %v1714 = vpop.f32.mrb[0].mxu0
          %v1715 = vadd.f32 0.0, %v1714
          %v1716 = vpop.f32.mrb[0].mxu0
          %v1717 = vpop.f32.mrb[0].mxu0
          %v1718 = vadd.f32 0.0, %v1717
          %v1719 = vpop.f32.mrb[0].mxu0
          %1720 = vdwg.mxu0
          %v1721 = vsel %vm846, %v1707, -1e+30
          %v1722 = vsel %vm847, %v1710, -1e+30
          %v1723 = vsel %vm848, %v1715, -1e+30
          %v1724 = vsel %vm849, %v1718, -1e+30
          %s1725 = scalar_lea.vmem [#allocation4], 96
          %v1726 = vld [vmem:[%s1725] sm:$0xff]
          %v1727 = vld [vmem:[%s1725 + $0x8] sm:$0xff]
          %v1728 = vld [vmem:[%s1725 + $0x10] sm:$0xff]
          %v1729 = vld [vmem:[%s1725 + $0x18] sm:$0xff]
          %v1730 = vsel %vm797, %v1721, -inf
          %1731 = vmax.xlane.f32.xlu0 %v1730
          %v1732 = vpop.xlane.xlu0 %1731
          %v1733 = vsel %vm797, %v1722, -inf
          %1734 = vmax.xlane.f32.xlu0 %v1733
          %v1735 = vpop.xlane.xlu0 %1734
          %v1736 = vsel %vm797, %v1723, -inf
          %1737 = vmax.xlane.f32.xlu0 %v1736
          %v1738 = vpop.xlane.xlu0 %1737
          %v1739 = vsel %vm797, %v1724, -inf
          %1740 = vmax.xlane.f32.xlu0 %v1739
          %v1741 = vpop.xlane.xlu0 %1740
          %v1742 = vmax.f32 %v1726, %v1732
          %v1743 = vmax.f32 %v1727, %v1735
          %v1744 = vmax.f32 %v1728, %v1738
          %v1745 = vmax.f32 %v1729, %v1741
          %v1746 = vsub.f32 %v1726, %v1742
          %v1747 = vsub.f32 %v1727, %v1743
          %v1748 = vsub.f32 %v1728, %v1744
          %v1749 = vsub.f32 %v1729, %v1745
          %v1750 = vmul.f32 %v1746, 1.442695
          %v1751 = vpow.pop %v1750
          %v1752 = vmul.f32 %v1747, 1.442695
          %v1753 = vpow.pop %v1752
          %v1754 = vmul.f32 %v1748, 1.442695
          %v1755 = vpow.pop %v1754
          %v1756 = vmul.f32 %v1749, 1.442695
          %v1757 = vpow.pop %v1756
          %1759 = vset.pattern.permute.xlu0 0
          %1760 = vperm.xlu0 %1759, %v1742
          %v1761 = vpop.permute.xlu0 %1760
          %1764 = vset.pattern.permute.xlu0 0
          %1765 = vperm.xlu0 %1764, %v1743
          %v1766 = vpop.permute.xlu0 %1765
          %1769 = vset.pattern.permute.xlu0 0
          %1770 = vperm.xlu0 %1769, %v1744
          %v1771 = vpop.permute.xlu0 %1770
          %1774 = vset.pattern.permute.xlu0 0
          %1775 = vperm.xlu0 %1774, %v1745
          %v1776 = vpop.permute.xlu0 %1775
          %v1778 = vsub.f32 %v1721, %v1761
          %v1779 = vsub.f32 %v1722, %v1766
          %v1780 = vsub.f32 %v1723, %v1771
          %v1781 = vsub.f32 %v1724, %v1776
          %v1782 = vmul.f32 %v1778, 1.442695
          %v1783 = vpow.pop %v1782
          %v1784 = vmul.f32 %v1779, 1.442695
          %v1785 = vpow.pop %v1784
          %v1786 = vmul.f32 %v1780, 1.442695
          %v1787 = vpow.pop %v1786
          %v1788 = vmul.f32 %v1781, 1.442695
          %v1789 = vpow.pop %v1788
          %s1790 = scalar_lea.vmem [#allocation5], 96
          %v1791 = vld [vmem:[%s1790] sm:$0xff]
          %v1792 = vld [vmem:[%s1790 + $0x8] sm:$0xff]
          %v1793 = vld [vmem:[%s1790 + $0x10] sm:$0xff]
          %v1794 = vld [vmem:[%s1790 + $0x18] sm:$0xff]
          %v1795 = vmul.f32 %v1751, %v1791
          %v1796 = vmul.f32 %v1753, %v1792
          %v1797 = vmul.f32 %v1755, %v1793
          %v1798 = vmul.f32 %v1757, %v1794
          %v1799 = vsel %vm797, %v1783, 0.0
          %1800 = vadd.xlane.f32.xlu0 %v1799
          %v1801 = vpop.xlane.xlu0 %1800
          %v1802 = vsel %vm797, %v1785, 0.0
          %1803 = vadd.xlane.f32.xlu0 %v1802
          %v1804 = vpop.xlane.xlu0 %1803
          %v1805 = vsel %vm797, %v1787, 0.0
          %1806 = vadd.xlane.f32.xlu0 %v1805
          %v1807 = vpop.xlane.xlu0 %1806
          %v1808 = vsel %vm797, %v1789, 0.0
          %1809 = vadd.xlane.f32.xlu0 %v1808
          %v1810 = vpop.xlane.xlu0 %1809
          %v1811 = vadd.f32 %v1795, %v1801
          %v1812 = vadd.f32 %v1796, %v1804
          %v1813 = vadd.f32 %v1797, %v1807
          %v1814 = vadd.f32 %v1798, %v1810
          %1815 = vst.msk [vmem:[%s1790] sm:$0xff] %vm764, %v1811
          %1816 = vst.msk [vmem:[%s1790 + $0x8] sm:$0xff] %vm764, %v1812
          %1817 = vst.msk [vmem:[%s1790 + $0x10] sm:$0xff] %vm764, %v1813
          %1818 = vst.msk [vmem:[%s1790 + $0x18] sm:$0xff] %vm764, %v1814
          %s1819 = scalar_lea.vmem [#allocation6], 96
          %v1820 = vld [vmem:[%s1819] sm:$0xff]
          %v1821 = vld [vmem:[%s1819 + $0x8] sm:$0xff]
          %v1822 = vld [vmem:[%s1819 + $0x10] sm:$0xff]
          %v1823 = vld [vmem:[%s1819 + $0x18] sm:$0xff]
          %1825 = vset.pattern.permute.xlu0 0
          %1826 = vperm.xlu0 %1825, %v1751
          %v1827 = vpop.permute.xlu0 %1826
          %1830 = vset.pattern.permute.xlu0 0
          %1831 = vperm.xlu0 %1830, %v1753
          %v1832 = vpop.permute.xlu0 %1831
          %1835 = vset.pattern.permute.xlu0 0
          %1836 = vperm.xlu0 %1835, %v1755
          %v1837 = vpop.permute.xlu0 %1836
          %1840 = vset.pattern.permute.xlu0 0
          %1841 = vperm.xlu0 %1840, %v1757
          %v1842 = vpop.permute.xlu0 %1841
          %v1844 = vmul.f32 %v1827, %v1820
          %v1845 = vmul.f32 %v1832, %v1821
          %v1846 = vmul.f32 %v1837, %v1822
          %v1847 = vmul.f32 %v1842, %v1823
          %v1848 = vpack.c.bf16 %v1785, %v1783
          %v1849 = vpack.c.bf16 %v1789, %v1787
          %1850 = vrot.lane.b32.xlu0 %v842, 32
          %v1851 = vpop.permute.xlu0 %1850
          %1852 = vrot.lane.b32.xlu0 %v843, 32
          %v1853 = vpop.permute.xlu0 %1852
          %v1857 = vsel %vm797, %v1848, 0
          %v1860 = vsel %vm797, %v1849, 0
          %1862 = vmatprep.subr.bf16.mxu0 0
          %1863 = vmatpush1.bf16.msra.mxu0 %v1851
          %1864 = vmatprep.subr.bf16.mxu0 0
          %1865 = vmatpush1.bf16.msra.mxu0 %v1853
          %1866 = vmatprep.subr.bf16.mxu0 0
          %1867 = vmatpush1.bf16.msra.mxu0 0
          %1868 = vmatprep.subr.bf16.mxu0 0
          %1869 = vmatpush1.bf16.msra.mxu0 0
          %1870 = vmatprep.subr.bf16.mxu0 0
          %1871 = vmatpush1.bf16.msra.mxu0 0
          %1872 = vmatprep.subr.bf16.mxu0 0
          %1873 = vmatpush1.bf16.msra.mxu0 0
          %1874 = vmatprep.subr.bf16.mxu0 0
          %1875 = vmatpush1.bf16.msra.mxu0 0
          %1876 = vmatprep.subr.bf16.mxu0 0
          %1877 = vmatpush1.bf16.msra.mxu0 0
          %1878 = vmatprep.subr.bf16.mxu0 0
          %1879 = vmatpush1.bf16.msra.mxu0 0
          %1880 = vmatprep.subr.bf16.mxu0 0
          %1881 = vmatpush1.bf16.msra.mxu0 0
          %1882 = vmatprep.subr.bf16.mxu0 0
          %1883 = vmatpush1.bf16.msra.mxu0 0
          %1884 = vmatprep.subr.bf16.mxu0 0
          %1885 = vmatpush1.bf16.msra.mxu0 0
          %1886 = vmatprep.subr.bf16.mxu0 0
          %1887 = vmatpush1.bf16.msra.mxu0 0
          %1888 = vmatprep.subr.bf16.mxu0 0
          %1889 = vmatpush1.bf16.msra.mxu0 0
          %1890 = vmatprep.subr.bf16.mxu0 0
          %1891 = vmatpush1.bf16.msra.mxu0 0
          %1892 = vmatprep.subr.bf16.mxu0 0
          %1893 = vmatpush1.bf16.msra.mxu0 0
          %1894 = vmatprep.mubr.bf16.mxu0 0
          %1895 = vmatmul.mubr.bf16.gmra.mrb[0].mxu0 %v1857
          %v1896 = vpop.f32.mrb[0].mxu0
          %v1897 = vadd.f32 0.0, %v1896
          %v1898 = vpop.f32.mrb[0].mxu0
          %v1899 = vpop.f32.mrb[0].mxu0
          %v1900 = vadd.f32 0.0, %v1899
          %v1901 = vpop.f32.mrb[0].mxu0
          %1902 = vmatprep.mubr.bf16.mxu0 0
          %1903 = vmatmul.mubr.bf16.gmra.mrb[0].mxu0 %v1860
          %v1904 = vpop.f32.mrb[0].mxu0
          %v1905 = vadd.f32 0.0, %v1904
          %v1906 = vpop.f32.mrb[0].mxu0
          %v1907 = vpop.f32.mrb[0].mxu0
          %v1908 = vadd.f32 0.0, %v1907
          %v1909 = vpop.f32.mrb[0].mxu0
          %1910 = vdwg.mxu0
          %v1911 = vadd.f32 %v1844, %v1897
          %v1912 = vadd.f32 %v1845, %v1900
          %v1913 = vadd.f32 %v1846, %v1905
          %v1914 = vadd.f32 %v1847, %v1908
          %1915 = vst.msk [vmem:[%s1819] sm:$0xff] %vm797, %v1911
          %1916 = vst.msk [vmem:[%s1819 + $0x8] sm:$0xff] %vm797, %v1912
          %1917 = vst.msk [vmem:[%s1819 + $0x10] sm:$0xff] %vm797, %v1913
          %1918 = vst.msk [vmem:[%s1819 + $0x18] sm:$0xff] %vm797, %v1914
          %1919 = vst.msk [vmem:[%s1725] sm:$0xff] %vm764, %v1742
          %1920 = vst.msk [vmem:[%s1725 + $0x8] sm:$0xff] %vm764, %v1743
          %1921 = vst.msk [vmem:[%s1725 + $0x10] sm:$0xff] %vm764, %v1744
          %1922 = vst.msk [vmem:[%s1725 + $0x18] sm:$0xff] %vm764, %v1745
        $region69: #{tpu_custom_call.1} parent=39 // loop_footer
          %s830 = sadd.s32 %s828, 1
        $region70: #{tpu_custom_call.1} parent=39 // loop_footer_branch
          %827 = sbr.rel target = $region66
        $region71: #{tpu_custom_call.1} parent=39 // loop_exit
          _
        %v1923 = vld [vmem:[#allocation6] sm:$0xff]
        %v1924 = vld [vmem:[#allocation6 + $0x8] sm:$0xff]
        %v1925 = vld [vmem:[#allocation6 + $0x10] sm:$0xff]
        %v1926 = vld [vmem:[#allocation6 + $0x18] sm:$0xff]
        %v1927 = vld [vmem:[#allocation5] sm:$0xff]
        %v1928 = vld [vmem:[#allocation5 + $0x8] sm:$0xff]
        %v1929 = vld [vmem:[#allocation5 + $0x10] sm:$0xff]
        %v1930 = vld [vmem:[#allocation5 + $0x18] sm:$0xff]
        %v1931 = vrcp.pop %v1927
        %v1932 = vrcp.pop %v1928
        %v1933 = vrcp.pop %v1929
        %v1934 = vrcp.pop %v1930
        %1936 = vset.pattern.permute.xlu0 0
        %1937 = vperm.xlu0 %1936, %v1931
        %v1938 = vpop.permute.xlu0 %1937
        %1941 = vset.pattern.permute.xlu0 0
        %1942 = vperm.xlu0 %1941, %v1932
        %v1943 = vpop.permute.xlu0 %1942
        %1946 = vset.pattern.permute.xlu0 0
        %1947 = vperm.xlu0 %1946, %v1933
        %v1948 = vpop.permute.xlu0 %1947
        %1951 = vset.pattern.permute.xlu0 0
        %1952 = vperm.xlu0 %1951, %v1934
        %v1953 = vpop.permute.xlu0 %1952
        %v1955 = vmul.f32 %v1923, %v1938
        %v1956 = vmul.f32 %v1924, %v1943
        %v1957 = vmul.f32 %v1925, %v1948
        %v1958 = vmul.f32 %v1926, %v1953
        %v1959 = vpack.c.bf16 %v1956, %v1955
        %v1960 = vpack.c.bf16 %v1958, %v1957
        %v1961 = vld [vmem:[#allocation13] sm:$0xf]
        %v1962 = vld [vmem:[#allocation13 + $0x4] sm:$0xf]
        %v1963 = vld [vmem:[#allocation13 + $0x8] sm:$0xf]
        %v1964 = vld [vmem:[#allocation13 + $0xc] sm:$0xf]
        %s1965 = scalar_lea.vmem [#allocation6], 32
        %v1966 = vld [vmem:[%s1965] sm:$0xff]
        %v1967 = vld [vmem:[%s1965 + $0x8] sm:$0xff]
        %v1968 = vld [vmem:[%s1965 + $0x10] sm:$0xff]
        %v1969 = vld [vmem:[%s1965 + $0x18] sm:$0xff]
        %s1970 = scalar_lea.vmem [#allocation5], 32
        %v1971 = vld [vmem:[%s1970] sm:$0xff]
        %v1972 = vld [vmem:[%s1970 + $0x8] sm:$0xff]
        %v1973 = vld [vmem:[%s1970 + $0x10] sm:$0xff]
        %v1974 = vld [vmem:[%s1970 + $0x18] sm:$0xff]
        %v1975 = vrcp.pop %v1971
        %v1976 = vrcp.pop %v1972
        %v1977 = vrcp.pop %v1973
        %v1978 = vrcp.pop %v1974
        %1980 = vset.pattern.permute.xlu0 0
        %1981 = vperm.xlu0 %1980, %v1975
        %v1982 = vpop.permute.xlu0 %1981
        %1985 = vset.pattern.permute.xlu0 0
        %1986 = vperm.xlu0 %1985, %v1976
        %v1987 = vpop.permute.xlu0 %1986
        %1990 = vset.pattern.permute.xlu0 0
        %1991 = vperm.xlu0 %1990, %v1977
        %v1992 = vpop.permute.xlu0 %1991
        %1995 = vset.pattern.permute.xlu0 0
        %1996 = vperm.xlu0 %1995, %v1978
        %v1997 = vpop.permute.xlu0 %1996
        %v1999 = vmul.f32 %v1966, %v1982
        %v2000 = vmul.f32 %v1967, %v1987
        %v2001 = vmul.f32 %v1968, %v1992
        %v2002 = vmul.f32 %v1969, %v1997
        %v2003 = vpack.c.bf16 %v2000, %v1999
        %v2004 = vpack.c.bf16 %v2002, %v2001
        %v2005 = vld [vmem:[#allocation13 + $0x10] sm:$0xf]
        %v2006 = vld [vmem:[#allocation13 + $0x14] sm:$0xf]
        %v2007 = vld [vmem:[#allocation13 + $0x18] sm:$0xf]
        %v2008 = vld [vmem:[#allocation13 + $0x1c] sm:$0xf]
        %v2013 = vunpack.c.l.b16 %v2005
        %v2014 = vunpack.c.l.b16 %v2006
        %v2015 = vunpack.c.l.b16 %v2007
        %v2016 = vunpack.c.l.b16 %v2008
        %v2017 = vpack.c.b16 %v2014, %v2013
        %v2018 = vpack.c.b16 %v2016, %v2015
        %v2022 = vsel %vm797, %v2003, 0
        %v2025 = vsel %vm797, %v2004, 0
        %2027 = vmatprep.subr.bf16.mxu0 0
        %2028 = vmatpush1.bf16.msra.mxu0 %v2017
        %2029 = vmatprep.subr.bf16.mxu0 0
        %2030 = vmatpush1.bf16.msra.mxu0 %v2018
        %2031 = vmatprep.subr.bf16.mxu0 0
        %2032 = vmatpush1.bf16.msra.mxu0 0
        %2033 = vmatprep.subr.bf16.mxu0 0
        %2034 = vmatpush1.bf16.msra.mxu0 0
        %2035 = vmatprep.subr.bf16.mxu0 0
        %2036 = vmatpush1.bf16.msra.mxu0 0
        %2037 = vmatprep.subr.bf16.mxu0 0
        %2038 = vmatpush1.bf16.msra.mxu0 0
        %2039 = vmatprep.subr.bf16.mxu0 0
        %2040 = vmatpush1.bf16.msra.mxu0 0
        %2041 = vmatprep.subr.bf16.mxu0 0
        %2042 = vmatpush1.bf16.msra.mxu0 0
        %2043 = vmatprep.subr.bf16.mxu0 0
        %2044 = vmatpush1.bf16.msra.mxu0 0
        %2045 = vmatprep.subr.bf16.mxu0 0
        %2046 = vmatpush1.bf16.msra.mxu0 0
        %2047 = vmatprep.subr.bf16.mxu0 0
        %2048 = vmatpush1.bf16.msra.mxu0 0
        %2049 = vmatprep.subr.bf16.mxu0 0
        %2050 = vmatpush1.bf16.msra.mxu0 0
        %2051 = vmatprep.subr.bf16.mxu0 0
        %2052 = vmatpush1.bf16.msra.mxu0 0
        %2053 = vmatprep.subr.bf16.mxu0 0
        %2054 = vmatpush1.bf16.msra.mxu0 0
        %2055 = vmatprep.subr.bf16.mxu0 0
        %2056 = vmatpush1.bf16.msra.mxu0 0
        %2057 = vmatprep.subr.bf16.mxu0 0
        %2058 = vmatpush1.bf16.msra.mxu0 0
        %2059 = vmatprep.mubr.bf16.mxu0 0
        %2060 = vmatmul.mubr.bf16.gmra.mrb[0].mxu0 %v2022
        %v2061 = vpop.f32.mrb[0].mxu0
        %v2062 = vadd.f32 0.0, %v2061
        %v2063 = vpop.f32.mrb[0].mxu0
        %v2064 = vpop.f32.mrb[0].mxu0
        %v2065 = vadd.f32 0.0, %v2064
        %v2066 = vpop.f32.mrb[0].mxu0
        %2067 = vmatprep.mubr.bf16.mxu0 0
        %2068 = vmatmul.mubr.bf16.gmra.mrb[0].mxu0 %v2025
        %v2069 = vpop.f32.mrb[0].mxu0
        %v2070 = vadd.f32 0.0, %v2069
        %v2071 = vpop.f32.mrb[0].mxu0
        %v2072 = vpop.f32.mrb[0].mxu0
        %v2073 = vadd.f32 0.0, %v2072
        %v2074 = vpop.f32.mrb[0].mxu0
        %2075 = vdwg.mxu0
        %v2080 = vunpack.c.l.b16 %v1961
        %v2081 = vunpack.c.l.b16 %v1962
        %v2082 = vunpack.c.l.b16 %v1963
        %v2083 = vunpack.c.l.b16 %v1964
        %v2084 = vpack.c.b16 %v2081, %v2080
        %v2085 = vpack.c.b16 %v2083, %v2082
        %v2089 = vsel %vm797, %v1959, 0
        %v2092 = vsel %vm797, %v1960, 0
        %2094 = vmatprep.subr.bf16.mxu0 0
        %2095 = vmatpush1.bf16.msra.mxu0 %v2084
        %2096 = vmatprep.subr.bf16.mxu0 0
        %2097 = vmatpush1.bf16.msra.mxu0 %v2085
        %2098 = vmatprep.subr.bf16.mxu0 0
        %2099 = vmatpush1.bf16.msra.mxu0 0
        %2100 = vmatprep.subr.bf16.mxu0 0
        %2101 = vmatpush1.bf16.msra.mxu0 0
        %2102 = vmatprep.subr.bf16.mxu0 0
        %2103 = vmatpush1.bf16.msra.mxu0 0
        %2104 = vmatprep.subr.bf16.mxu0 0
        %2105 = vmatpush1.bf16.msra.mxu0 0
        %2106 = vmatprep.subr.bf16.mxu0 0
        %2107 = vmatpush1.bf16.msra.mxu0 0
        %2108 = vmatprep.subr.bf16.mxu0 0
        %2109 = vmatpush1.bf16.msra.mxu0 0
        %2110 = vmatprep.subr.bf16.mxu0 0
        %2111 = vmatpush1.bf16.msra.mxu0 0
        %2112 = vmatprep.subr.bf16.mxu0 0
        %2113 = vmatpush1.bf16.msra.mxu0 0
        %2114 = vmatprep.subr.bf16.mxu0 0
        %2115 = vmatpush1.bf16.msra.mxu0 0
        %2116 = vmatprep.subr.bf16.mxu0 0
        %2117 = vmatpush1.bf16.msra.mxu0 0
        %2118 = vmatprep.subr.bf16.mxu0 0
        %2119 = vmatpush1.bf16.msra.mxu0 0
        %2120 = vmatprep.subr.bf16.mxu0 0
        %2121 = vmatpush1.bf16.msra.mxu0 0
        %2122 = vmatprep.subr.bf16.mxu0 0
        %2123 = vmatpush1.bf16.msra.mxu0 0
        %2124 = vmatprep.subr.bf16.mxu0 0
        %2125 = vmatpush1.bf16.msra.mxu0 0
        %2126 = vmatprep.mubr.bf16.mxu0 0
        %2127 = vmatmul.mubr.bf16.gmra.mrb[0].mxu0 %v2089
        %v2128 = vpop.f32.mrb[0].mxu0
        %v2129 = vadd.f32 %v2062, %v2128
        %v2130 = vpop.f32.mrb[0].mxu0
        %v2131 = vpop.f32.mrb[0].mxu0
        %v2132 = vadd.f32 %v2065, %v2131
        %v2133 = vpop.f32.mrb[0].mxu0
        %2134 = vmatprep.mubr.bf16.mxu0 0
        %2135 = vmatmul.mubr.bf16.gmra.mrb[0].mxu0 %v2092
        %v2136 = vpop.f32.mrb[0].mxu0
        %v2137 = vadd.f32 %v2070, %v2136
        %v2138 = vpop.f32.mrb[0].mxu0
        %v2139 = vpop.f32.mrb[0].mxu0
        %v2140 = vadd.f32 %v2073, %v2139
        %v2141 = vpop.f32.mrb[0].mxu0
        %2142 = vdwg.mxu0
        %s2143 = scalar_lea.vmem [#allocation6], 64
        %v2144 = vld [vmem:[%s2143] sm:$0xff]
        %v2145 = vld [vmem:[%s2143 + $0x8] sm:$0xff]
        %v2146 = vld [vmem:[%s2143 + $0x10] sm:$0xff]
        %v2147 = vld [vmem:[%s2143 + $0x18] sm:$0xff]
        %s2148 = scalar_lea.vmem [#allocation5], 64
        %v2149 = vld [vmem:[%s2148] sm:$0xff]
        %v2150 = vld [vmem:[%s2148 + $0x8] sm:$0xff]
        %v2151 = vld [vmem:[%s2148 + $0x10] sm:$0xff]
        %v2152 = vld [vmem:[%s2148 + $0x18] sm:$0xff]
        %v2153 = vrcp.pop %v2149
        %v2154 = vrcp.pop %v2150
        %v2155 = vrcp.pop %v2151
        %v2156 = vrcp.pop %v2152
        %2158 = vset.pattern.permute.xlu0 0
        %2159 = vperm.xlu0 %2158, %v2153
        %v2160 = vpop.permute.xlu0 %2159
        %2163 = vset.pattern.permute.xlu0 0
        %2164 = vperm.xlu0 %2163, %v2154
        %v2165 = vpop.permute.xlu0 %2164
        %2168 = vset.pattern.permute.xlu0 0
        %2169 = vperm.xlu0 %2168, %v2155
        %v2170 = vpop.permute.xlu0 %2169
        %2173 = vset.pattern.permute.xlu0 0
        %2174 = vperm.xlu0 %2173, %v2156
        %v2175 = vpop.permute.xlu0 %2174
        %v2177 = vmul.f32 %v2144, %v2160
        %v2178 = vmul.f32 %v2145, %v2165
        %v2179 = vmul.f32 %v2146, %v2170
        %v2180 = vmul.f32 %v2147, %v2175
        %v2181 = vpack.c.bf16 %v2178, %v2177
        %v2182 = vpack.c.bf16 %v2180, %v2179
        %v2183 = vld [vmem:[#allocation13 + $0x20] sm:$0xf]
        %v2184 = vld [vmem:[#allocation13 + $0x24] sm:$0xf]
        %v2185 = vld [vmem:[#allocation13 + $0x28] sm:$0xf]
        %v2186 = vld [vmem:[#allocation13 + $0x2c] sm:$0xf]
        %v2191 = vunpack.c.l.b16 %v2183
        %v2192 = vunpack.c.l.b16 %v2184
        %v2193 = vunpack.c.l.b16 %v2185
        %v2194 = vunpack.c.l.b16 %v2186
        %v2195 = vpack.c.b16 %v2192, %v2191
        %v2196 = vpack.c.b16 %v2194, %v2193
        %v2200 = vsel %vm797, %v2181, 0
        %v2203 = vsel %vm797, %v2182, 0
        %2205 = vmatprep.subr.bf16.mxu0 0
        %2206 = vmatpush1.bf16.msra.mxu0 %v2195
        %2207 = vmatprep.subr.bf16.mxu0 0
        %2208 = vmatpush1.bf16.msra.mxu0 %v2196
        %2209 = vmatprep.subr.bf16.mxu0 0
        %2210 = vmatpush1.bf16.msra.mxu0 0
        %2211 = vmatprep.subr.bf16.mxu0 0
        %2212 = vmatpush1.bf16.msra.mxu0 0
        %2213 = vmatprep.subr.bf16.mxu0 0
        %2214 = vmatpush1.bf16.msra.mxu0 0
        %2215 = vmatprep.subr.bf16.mxu0 0
        %2216 = vmatpush1.bf16.msra.mxu0 0
        %2217 = vmatprep.subr.bf16.mxu0 0
        %2218 = vmatpush1.bf16.msra.mxu0 0
        %2219 = vmatprep.subr.bf16.mxu0 0
        %2220 = vmatpush1.bf16.msra.mxu0 0
        %2221 = vmatprep.subr.bf16.mxu0 0
        %2222 = vmatpush1.bf16.msra.mxu0 0
        %2223 = vmatprep.subr.bf16.mxu0 0
        %2224 = vmatpush1.bf16.msra.mxu0 0
        %2225 = vmatprep.subr.bf16.mxu0 0
        %2226 = vmatpush1.bf16.msra.mxu0 0
        %2227 = vmatprep.subr.bf16.mxu0 0
        %2228 = vmatpush1.bf16.msra.mxu0 0
        %2229 = vmatprep.subr.bf16.mxu0 0
        %2230 = vmatpush1.bf16.msra.mxu0 0
        %2231 = vmatprep.subr.bf16.mxu0 0
        %2232 = vmatpush1.bf16.msra.mxu0 0
        %2233 = vmatprep.subr.bf16.mxu0 0
        %2234 = vmatpush1.bf16.msra.mxu0 0
        %2235 = vmatprep.subr.bf16.mxu0 0
        %2236 = vmatpush1.bf16.msra.mxu0 0
        %2237 = vmatprep.mubr.bf16.mxu0 0
        %2238 = vmatmul.mubr.bf16.gmra.mrb[0].mxu0 %v2200
        %v2239 = vpop.f32.mrb[0].mxu0
        %v2240 = vadd.f32 0.0, %v2239
        %v2241 = vpop.f32.mrb[0].mxu0
        %v2242 = vpop.f32.mrb[0].mxu0
        %v2243 = vadd.f32 0.0, %v2242
        %v2244 = vpop.f32.mrb[0].mxu0
        %2245 = vmatprep.mubr.bf16.mxu0 0
        %2246 = vmatmul.mubr.bf16.gmra.mrb[0].mxu0 %v2203
        %v2247 = vpop.f32.mrb[0].mxu0
        %v2248 = vadd.f32 0.0, %v2247
        %v2249 = vpop.f32.mrb[0].mxu0
        %v2250 = vpop.f32.mrb[0].mxu0
        %v2251 = vadd.f32 0.0, %v2250
        %v2252 = vpop.f32.mrb[0].mxu0
        %2253 = vdwg.mxu0
        %v2254 = vadd.f32 %v2129, %v2240
        %v2255 = vadd.f32 %v2132, %v2243
        %v2256 = vadd.f32 %v2137, %v2248
        %v2257 = vadd.f32 %v2140, %v2251
        %s2258 = scalar_lea.vmem [#allocation6], 96
        %v2259 = vld [vmem:[%s2258] sm:$0xff]
        %v2260 = vld [vmem:[%s2258 + $0x8] sm:$0xff]
        %v2261 = vld [vmem:[%s2258 + $0x10] sm:$0xff]
        %v2262 = vld [vmem:[%s2258 + $0x18] sm:$0xff]
        %s2263 = scalar_lea.vmem [#allocation5], 96
        %v2264 = vld [vmem:[%s2263] sm:$0xff]
        %v2265 = vld [vmem:[%s2263 + $0x8] sm:$0xff]
        %v2266 = vld [vmem:[%s2263 + $0x10] sm:$0xff]
        %v2267 = vld [vmem:[%s2263 + $0x18] sm:$0xff]
        %v2268 = vrcp.pop %v2264
        %v2269 = vrcp.pop %v2265
        %v2270 = vrcp.pop %v2266
        %v2271 = vrcp.pop %v2267
        %2273 = vset.pattern.permute.xlu0 0
        %2274 = vperm.xlu0 %2273, %v2268
        %v2275 = vpop.permute.xlu0 %2274
        %2278 = vset.pattern.permute.xlu0 0
        %2279 = vperm.xlu0 %2278, %v2269
        %v2280 = vpop.permute.xlu0 %2279
        %2283 = vset.pattern.permute.xlu0 0
        %2284 = vperm.xlu0 %2283, %v2270
        %v2285 = vpop.permute.xlu0 %2284
        %2288 = vset.pattern.permute.xlu0 0
        %2289 = vperm.xlu0 %2288, %v2271
        %v2290 = vpop.permute.xlu0 %2289
        %v2292 = vmul.f32 %v2259, %v2275
        %v2293 = vmul.f32 %v2260, %v2280
        %v2294 = vmul.f32 %v2261, %v2285
        %v2295 = vmul.f32 %v2262, %v2290
        %v2296 = vpack.c.bf16 %v2293, %v2292
        %v2297 = vpack.c.bf16 %v2295, %v2294
        %v2298 = vld [vmem:[#allocation13 + $0x30] sm:$0xf]
        %v2299 = vld [vmem:[#allocation13 + $0x34] sm:$0xf]
        %v2300 = vld [vmem:[#allocation13 + $0x38] sm:$0xf]
        %v2301 = vld [vmem:[#allocation13 + $0x3c] sm:$0xf]
        %v2306 = vunpack.c.l.b16 %v2298
        %v2307 = vunpack.c.l.b16 %v2299
        %v2308 = vunpack.c.l.b16 %v2300
        %v2309 = vunpack.c.l.b16 %v2301
        %v2310 = vpack.c.b16 %v2307, %v2306
        %v2311 = vpack.c.b16 %v2309, %v2308
        %v2315 = vsel %vm797, %v2296, 0
        %v2318 = vsel %vm797, %v2297, 0
        %2320 = vmatprep.subr.bf16.mxu0 0
        %2321 = vmatpush1.bf16.msra.mxu0 %v2310
        %2322 = vmatprep.subr.bf16.mxu0 0
        %2323 = vmatpush1.bf16.msra.mxu0 %v2311
        %2324 = vmatprep.subr.bf16.mxu0 0
        %2325 = vmatpush1.bf16.msra.mxu0 0
        %2326 = vmatprep.subr.bf16.mxu0 0
        %2327 = vmatpush1.bf16.msra.mxu0 0
        %2328 = vmatprep.subr.bf16.mxu0 0
        %2329 = vmatpush1.bf16.msra.mxu0 0
        %2330 = vmatprep.subr.bf16.mxu0 0
        %2331 = vmatpush1.bf16.msra.mxu0 0
        %2332 = vmatprep.subr.bf16.mxu0 0
        %2333 = vmatpush1.bf16.msra.mxu0 0
        %2334 = vmatprep.subr.bf16.mxu0 0
        %2335 = vmatpush1.bf16.msra.mxu0 0
        %2336 = vmatprep.subr.bf16.mxu0 0
        %2337 = vmatpush1.bf16.msra.mxu0 0
        %2338 = vmatprep.subr.bf16.mxu0 0
        %2339 = vmatpush1.bf16.msra.mxu0 0
        %2340 = vmatprep.subr.bf16.mxu0 0
        %2341 = vmatpush1.bf16.msra.mxu0 0
        %2342 = vmatprep.subr.bf16.mxu0 0
        %2343 = vmatpush1.bf16.msra.mxu0 0
        %2344 = vmatprep.subr.bf16.mxu0 0
        %2345 = vmatpush1.bf16.msra.mxu0 0
        %2346 = vmatprep.subr.bf16.mxu0 0
        %2347 = vmatpush1.bf16.msra.mxu0 0
        %2348 = vmatprep.subr.bf16.mxu0 0
        %2349 = vmatpush1.bf16.msra.mxu0 0
        %2350 = vmatprep.subr.bf16.mxu0 0
        %2351 = vmatpush1.bf16.msra.mxu0 0
        %2352 = vmatprep.mubr.bf16.mxu0 0
        %2353 = vmatmul.mubr.bf16.gmra.mrb[0].mxu0 %v2315
        %v2354 = vpop.f32.mrb[0].mxu0
        %v2355 = vadd.f32 0.0, %v2354
        %v2356 = vpop.f32.mrb[0].mxu0
        %v2357 = vpop.f32.mrb[0].mxu0
        %v2358 = vadd.f32 0.0, %v2357
        %v2359 = vpop.f32.mrb[0].mxu0
        %2360 = vmatprep.mubr.bf16.mxu0 0
        %2361 = vmatmul.mubr.bf16.gmra.mrb[0].mxu0 %v2318
        %v2362 = vpop.f32.mrb[0].mxu0
        %v2363 = vadd.f32 0.0, %v2362
        %v2364 = vpop.f32.mrb[0].mxu0
        %v2365 = vpop.f32.mrb[0].mxu0
        %v2366 = vadd.f32 0.0, %v2365
        %v2367 = vpop.f32.mrb[0].mxu0
        %2368 = vdwg.mxu0
        %v2369 = vadd.f32 %v2254, %v2355
        %v2370 = vadd.f32 %v2255, %v2358
        %v2371 = vadd.f32 %v2256, %v2363
        %v2372 = vadd.f32 %v2257, %v2366
        %v2373 = vld [vmem:[#allocation15] sm:$0x1]
        %v2375 = vlaneseq
        %v2376 = vshrl.u32 %v2375, 7
        %v2377 = vsub.s32 0, %v2376
        %v2378 = vrot.slane %v2373, %v2377
        %v2380 = vadd.f32 %v2369, %v2378
        %v2381 = vadd.f32 %v2370, %v2378
        %v2382 = vadd.f32 %v2371, %v2378
        %v2383 = vadd.f32 %v2372, %v2378
        %2384 = vst [vmem:[%s312] sm:$0xff] %v2380
        %2385 = vst [vmem:[%s312 + $0x8] sm:$0xff] %v2381
        %2386 = vst [vmem:[%s312 + $0x10] sm:$0xff] %v2382
        %2387 = vst [vmem:[%s312 + $0x18] sm:$0xff] %v2383
        %s2388 = sand.u32 %s156, 1
        %s2389 = scalar_lea.sflag [#allocation9], %s2388
        %s2390 = sand.u32 %s156, 1
        %s2391 = smul.addr %s2390, 32
        %s2392 = scalar_lea.vmem [#allocation16], %s2391
        // Predicated region
        $region72: #{tpu_custom_call.1} parent=39 // pred_check
          %p2393 = pneg %p166
        $region73: #{tpu_custom_call.1} parent=39 // pred_check_branch
          %2395 = sbr.rel (%p2393) target = $region75
        $region74: #{tpu_custom_call.1} parent=39 // pred_region
          %s2396 = smul.u32 4, %s29
          %s2398 = ssub.s32 512, 512
          %2399 = vsyncadd %s2389, %s2398
          %s2400 = smul.addr %s28, 16
          %s2401 = sadd.s32 %s2396, %s2400
          %s2402 = smul.addr %s2401, 128
          %s2403 = scalar_lea.hbm %s5, %s2402
          %s2404 = sshll.u32 %s2392, 4
          %s2405 = int_to_ptr.vmem [resolvable:$true] %s2404
          %2410 = dma.vmem_to_hbm [thread:$0]  %s2405, 512, %s2403, %s2389, 128, 128, 8
        $region75: #{tpu_custom_call.1} parent=39 // pred_fallthru
          _
      $region40: #{tpu_custom_call.1} parent=5 // pred_fallthru
        _
      %p2411 = scmp.le.s32.totalorder 2, %s19
      // Predicated region
      $region76: #{tpu_custom_call.1} parent=5 // pred_check
        %p2412 = pneg %p2411
      $region77: #{tpu_custom_call.1} parent=5 // pred_check_branch
        %2414 = sbr.rel (%p2412) target = $region79
      $region78: #{tpu_custom_call.1} parent=5 // pred_region
        %s2415 = ssub.s32 %s19, 2
        // Predicated region
        $region80: #{tpu_custom_call.1} parent=78 // pred_check
          %p2416 = pneg %p172
        $region81: #{tpu_custom_call.1} parent=78 // pred_check_branch
          %2418 = sbr.rel (%p2416) target = $region83
        $region82: #{tpu_custom_call.1} parent=78 // pred_region
          %s2419 = sand.u32 %s157, 1
          %s2420 = scalar_lea.sflag [#allocation9], %s2419
          %s2421 = sand.u32 %s157, 1
          %s2422 = smul.addr %s2421, 32
          %s2423 = scalar_lea.vmem [#allocation16], %s2422
          %2424 = dma.done %s2420, 512
        $region83: #{tpu_custom_call.1} parent=78 // pred_fallthru
          _
      $region79: #{tpu_custom_call.1} parent=5 // pred_fallthru
        _
    $region6: #{tpu_custom_call.1} parent=1 // loop_footer
      %s23 = sadd.s32 1, %s19
    $region7: #{tpu_custom_call.1} parent=1 // loop_footer_branch
      %18 = sbr.rel target = $region3
    $region8: #{tpu_custom_call.1} parent=1 // loop_exit
      _
    %2425 = vsyncpa [#allocation8], 1
    %s2426 = scalar_lea.sflag [#allocation8], 1
    %2427 = vsyncpa %s2426, 1
    %2428 = vsyncpa [#allocation11], 1
    %2429 = vsyncpa [#allocation14], 1
    %2430 = vsyncpa [#allocation9], 1
    %s2431 = scalar_lea.sflag [#allocation9], 1
    %2432 = vsyncpa %s2431, 1

</llo_original>
